<compile_context>
chip_gen: v7x
topology: tpu7x:2x2x1
jax: 0.10.0
libtpu: 0.0.40
codegen_flags: <defaults>
</compile_context>

<pallas_src>
import functools

import jax
import jax.numpy as jnp
from jax.experimental import pallas as pl
from jax.experimental.pallas import tpu as pltpu


_MXU_DTYPE = jnp.bfloat16  # MXU inputs; accumulation stays f32.


# ---------------------------- kernel helpers ----------------------------

def _project(w_ref, b_ref, x):
    """1x1 conv in channel-major layout: (Cout, Cin) @ (Cin, M) + bias(Cout,1)."""
    y = jnp.dot(w_ref[...].astype(_MXU_DTYPE), x.astype(_MXU_DTYPE),
                preferred_element_type=jnp.float32)
    return y + b_ref[...]


def _multihead_attention(q, k, v, *, nh, hd):
    """q: (C, M), k/v: (C, N), channel-major; heads are contiguous channel blocks.
    Returns (C, M) = concat_h softmax(q_h^T k_h) applied to v_h (channel-major)."""
    outs = []
    for h in range(nh):                       # nh is tiny & static -> unrolled
        sl = slice(h * hd, (h + 1) * hd)
        qh = q[sl].astype(_MXU_DTYPE)         # (hd, M)
        kh = k[sl].astype(_MXU_DTYPE)         # (hd, N)
        vh = v[sl].astype(_MXU_DTYPE)         # (hd, N)
        # s[m, n] = sum_c q[c, m] * k[c, n]   (== torch 'b c m, b c n -> b m n')
        s = jax.lax.dot_general(qh, kh, (((0,), (0,)), ((), ())),
                                preferred_element_type=jnp.float32)   # (M, N)
        s_max = jnp.max(s, axis=-1, keepdims=True)
        p = jnp.exp(s - s_max)
        denom = jnp.sum(p, axis=-1, keepdims=True)
        p = p * pl.reciprocal(denom, approx=True)   # divide on the EUP slot
        # o[c, m] = sum_n v[c, n] * p[m, n]   (== torch 'b m n, b c n -> b c m')
        oh = jax.lax.dot_general(vh, p.astype(_MXU_DTYPE),
                                 (((1,), (1,)), ((), ())),
                                 preferred_element_type=jnp.float32)  # (hd, M)
        outs.append(oh)
    return jnp.concatenate(outs, axis=0)            # (C, M), lane-dense


# ------------------------------ fused kernels ----------------------------

def _pa_kernel(x_ref, wq_ref, bq_ref, wkv_ref, bkv_ref, wo_ref, bo_ref, o_ref,
               *, nh, hd, scale):
    """sr_ratio == 1: q/k/v all projected from x; one batch element per step."""
    C = nh * hd
    x = x_ref[...].astype(jnp.float32)                # (C, Nq)
    q = _project(wq_ref, bq_ref, x) * scale           # (C, Nq)
    kv = _project(wkv_ref, bkv_ref, x)                # (2C, Nq)
    o = _multihead_attention(q, kv[:C], kv[C:], nh=nh, hd=hd)
    y = _project(wo_ref, bo_ref, o)                   # (C, Nq)
    o_ref[...] = y.astype(o_ref.dtype)


def _pa_kernel_ds(x_ref, patch_ref, wq_ref, bq_ref, wds_ref, bds_ref,
                  lng_ref, lnb_ref, wkv_ref, bkv_ref, wo_ref, bo_ref, o_ref,
                  *, nh, hd, scale, eps):
    """sr_ratio > 1: k/v projected from proj_ds(x) = strided conv + LayerNorm(C)."""
    C = nh * hd
    x = x_ref[...].astype(jnp.float32)                # (C, Nq)
    q = _project(wq_ref, bq_ref, x) * scale
    # proj_ds: kernel=stride=sr conv as a patch matmul, then LayerNorm over C.
    xds = _project(wds_ref, bds_ref, patch_ref[...].astype(jnp.float32))  # (C, Nk)
    mu = jnp.mean(xds, axis=0, keepdims=True)
    var = jnp.mean((xds - mu) ** 2, axis=0, keepdims=True)
    xds = (xds - mu) * jax.lax.rsqrt(var + eps) * lng_ref[...] + lnb_ref[...]
    kv = _project(wkv_ref, bkv_ref, xds)              # (2C, Nk)
    o = _multihead_attention(q, kv[:C], kv[C:], nh=nh, hd=hd)
    y = _project(wo_ref, bo_ref, o)
    o_ref[...] = y.astype(o_ref.dtype)


# ------------------------------ forward ----------------------------------

def _batched(shape):
    """(B, d0, d1) array -> per-batch (d0, d1) block (leading dim squeezed)."""
    return pl.BlockSpec((None,) + shape, lambda b: (b, 0, 0))


def _shared(shape):
    """Replicated 2-D parameter: same full block every grid step."""
    return pl.BlockSpec(shape, lambda b: (0, 0))


def pyramid_attention_forward(x, params, *, num_heads, sr_ratio=1, ln_eps=1e-5):
    B, C, H, W = x.shape
    assert C % num_heads == 0
    hd = C // num_heads
    scale = hd ** (-0.5)
    Nq = H * W

    x_cm = x.reshape(B, C, Nq)                        # free reshape (NCHW kept)

    wq, bq = params['wq'], params['bq'].reshape(C, 1)
    wkv, bkv = params['wkv'], params['bkv'].reshape(2 * C, 1)
    wo, bo = params['wo'], params['bo'].reshape(C, 1)

    cparams = pltpu.CompilerParams(dimension_semantics=("parallel",))
    out_shape = jax.ShapeDtypeStruct((B, C, Nq), x.dtype)
    out_spec = _batched((C, Nq))

    if sr_ratio > 1:
        sr = sr_ratio
        Hk, Wk = H // sr, W // sr
        Nk = Hk * Wk
        # TODO(synk): space-to-depth patch extraction for the strided downsample
        # conv stays in XLA (one reshape+transpose); the conv itself + LayerNorm
        # are fused into the Pallas kernel as a matmul.
        patches = (x.reshape(B, C, Hk, sr, Wk, sr)
                    .transpose(0, 1, 3, 5, 2, 4)
                    .reshape(B, C * sr * sr, Nk))
        wds = params['wds'].reshape(C, C * sr * sr)
        bds = params['bds'].reshape(C, 1)
        lng = params['ln_g'].reshape(C, 1)
        lnb = params['ln_b'].reshape(C, 1)
        kern = functools.partial(_pa_kernel_ds, nh=num_heads, hd=hd,
                                 scale=scale, eps=ln_eps)
        out = pl.pallas_call(
            kern,
            out_shape=out_shape,
            grid=(B,),
            in_specs=[_batched((C, Nq)), _batched((C * sr * sr, Nk)),
                      _shared((C, C)), _shared((C, 1)),
                      _shared((C, C * sr * sr)), _shared((C, 1)),
                      _shared((C, 1)), _shared((C, 1)),
                      _shared((2 * C, C)), _shared((2 * C, 1)),
                      _shared((C, C)), _shared((C, 1))],
            out_specs=out_spec,
            compiler_params=cparams,
        )(x_cm, patches, wq, bq, wds, bds, lng, lnb, wkv, bkv, wo, bo)
    else:
        kern = functools.partial(_pa_kernel, nh=num_heads, hd=hd, scale=scale)
        out = pl.pallas_call(
            kern,
            out_shape=out_shape,
            grid=(B,),
            in_specs=[_batched((C, Nq)),
                      _shared((C, C)), _shared((C, 1)),
                      _shared((2 * C, C)), _shared((2 * C, 1)),
                      _shared((C, C)), _shared((C, 1))],
            out_specs=out_spec,
            compiler_params=cparams,
        )(x_cm, wq, bq, wkv, bkv, wo, bo)

    # matches torch: x.reshape(B, C, H, W); drops are identity (p=0.0)
    return out.reshape(B, C, H, W), None, None


# --------------------------- parameter init ------------------------------

def init_params(key, dim, num_heads, sr_ratio):
    ks = jax.random.split(key, 8)

    def nrm(k, shape, s=0.02):
        return (s * jax.random.normal(k, shape)).astype(jnp.float32)

    p = {
        'wq': nrm(ks[0], (dim, dim)),       'bq': nrm(ks[1], (dim,)),
        'wkv': nrm(ks[2], (2 * dim, dim)),  'bkv': nrm(ks[3], (2 * dim,)),
        'wo': nrm(ks[4], (dim, dim)),       'bo': nrm(ks[5], (dim,)),
    }
    if sr_ratio > 1:
        p['wds'] = nrm(ks[6], (dim, dim, sr_ratio, sr_ratio))
        p['bds'] = nrm(ks[7], (dim,))
        p['ln_g'] = jnp.ones((dim,), jnp.float32)
        p['ln_b'] = jnp.zeros((dim,), jnp.float32)
    return p


# -------------------------------- main ------------------------------------

if __name__ == "__main__":
    B, dim, H, W = 2, 32, 16, 16
    num_heads = 2

    key = jax.random.PRNGKey(0)
    kx, kp1, kp2 = jax.random.split(key, 3)
    x = jax.random.normal(kx, (B, dim, H, W), jnp.float32)

    fwd = jax.jit(pyramid_attention_forward,
                  static_argnames=("num_heads", "sr_ratio", "ln_eps"))

    # sr_ratio = 1: attention over the full key grid.
    params1 = init_params(kp1, dim, num_heads, sr_ratio=1)
    y1, a1, b1 = fwd(x, params1, num_heads=num_heads, sr_ratio=1)

    # sr_ratio = 2: pyramid downsampling of k/v (strided conv + LayerNorm).
    params2 = init_params(kp2, dim, num_heads, sr_ratio=2)
    y2, a2, b2 = fwd(x, params2, num_heads=num_heads, sr_ratio=2)

    jax.block_until_ready((y1, y2))
    assert y1.shape == (B, dim, H, W) and y2.shape == (B, dim, H, W)
    assert a1 is None and b1 is None and a2 is None and b2 is None
    assert bool(jnp.all(jnp.isfinite(y1))) and bool(jnp.all(jnp.isfinite(y2)))
    print("KERNEL_OK")
</pallas_src>

<mosaic_0001>
module attributes {stable_mosaic.version = 11 : i64} {
  func.func @_pa_kernel(%arg0: i32, %arg1: memref<1x32x256xf32, #tpu.memory_space<vmem>>, %arg2: memref<32x32xf32, #tpu.memory_space<vmem>>, %arg3: memref<32x1xf32, #tpu.memory_space<vmem>>, %arg4: memref<64x32xf32, #tpu.memory_space<vmem>>, %arg5: memref<64x1xf32, #tpu.memory_space<vmem>>, %arg6: memref<32x32xf32, #tpu.memory_space<vmem>>, %arg7: memref<32x1xf32, #tpu.memory_space<vmem>>, %arg8: memref<1x32x256xf32, #tpu.memory_space<vmem>>) attributes {dimension_semantics = [#tpu.dimension_semantics<parallel>], iteration_bounds = array<i64: 2>, scalar_prefetch = 0 : i64, scratch_operands = 0 : i64, tpu.core_type = #tpu.core_type<tc>, window_params = [{transform_indices = @transform_0, window_bounds = array<i64: 1, 32, 256>}, {pipeline_mode = #tpu.pipeline_mode<synchronous>, transform_indices = @transform_1, window_bounds = array<i64: 32, 32>}, {pipeline_mode = #tpu.pipeline_mode<synchronous>, transform_indices = @transform_2, window_bounds = array<i64: 32, 1>}, {pipeline_mode = #tpu.pipeline_mode<synchronous>, transform_indices = @transform_3, window_bounds = array<i64: 64, 32>}, {pipeline_mode = #tpu.pipeline_mode<synchronous>, transform_indices = @transform_4, window_bounds = array<i64: 64, 1>}, {pipeline_mode = #tpu.pipeline_mode<synchronous>, transform_indices = @transform_5, window_bounds = array<i64: 32, 32>}, {pipeline_mode = #tpu.pipeline_mode<synchronous>, transform_indices = @transform_6, window_bounds = array<i64: 32, 1>}, {transform_indices = @transform_7, window_bounds = array<i64: 1, 32, 256>}]} {
    %c0 = arith.constant 0 : index
    %c0_0 = arith.constant 0 : index
    %c0_1 = arith.constant 0 : index
    %0 = vector.load %arg1[%c0, %c0_0, %c0_1] : memref<1x32x256xf32, #tpu.memory_space<vmem>>, vector<1x32x256xf32>
    %1 = vector.shape_cast %0 : vector<1x32x256xf32> to vector<32x256xf32>
    %c0_2 = arith.constant 0 : index
    %c0_3 = arith.constant 0 : index
    %2 = vector.load %arg2[%c0_2, %c0_3] : memref<32x32xf32, #tpu.memory_space<vmem>>, vector<32x32xf32>
    %3 = arith.truncf %2 : vector<32x32xf32> to vector<32x32xbf16>
    %4 = arith.truncf %1 : vector<32x256xf32> to vector<32x256xbf16>
    %cst = arith.constant dense<0.000000e+00> : vector<32x256xf32>
    %5 = tpu.matmul %3, %4, %cst {dimension_numbers = #tpu.dot_dimension_numbers<[1], [0], [0], [1], [0, 0, 1, 1], [], []>} : vector<32x32xbf16>, vector<32x256xbf16>, vector<32x256xf32> -> vector<32x256xf32>
    %c0_4 = arith.constant 0 : index
    %c0_5 = arith.constant 0 : index
    %6 = vector.load %arg3[%c0_4, %c0_5] : memref<32x1xf32, #tpu.memory_space<vmem>>, vector<32x1xf32>
    %7 = vector.broadcast %6 : vector<32x1xf32> to vector<32x256xf32>
    %8 = arith.addf %5, %7 : vector<32x256xf32>
    %cst_6 = arith.constant 2.500000e-01 : f32
    %9 = vector.broadcast %cst_6 : f32 to vector<32x256xf32>
    %10 = arith.mulf %8, %9 : vector<32x256xf32>
    %c0_7 = arith.constant 0 : index
    %c0_8 = arith.constant 0 : index
    %11 = vector.load %arg4[%c0_7, %c0_8] : memref<64x32xf32, #tpu.memory_space<vmem>>, vector<64x32xf32>
    %12 = arith.truncf %11 : vector<64x32xf32> to vector<64x32xbf16>
    %13 = arith.truncf %1 : vector<32x256xf32> to vector<32x256xbf16>
    %cst_9 = arith.constant dense<0.000000e+00> : vector<64x256xf32>
    %14 = tpu.matmul %12, %13, %cst_9 {dimension_numbers = #tpu.dot_dimension_numbers<[1], [0], [0], [1], [0, 0, 1, 1], [], []>} : vector<64x32xbf16>, vector<32x256xbf16>, vector<64x256xf32> -> vector<64x256xf32>
    %c0_10 = arith.constant 0 : index
    %c0_11 = arith.constant 0 : index
    %15 = vector.load %arg5[%c0_10, %c0_11] : memref<64x1xf32, #tpu.memory_space<vmem>>, vector<64x1xf32>
    %16 = vector.broadcast %15 : vector<64x1xf32> to vector<64x256xf32>
    %17 = arith.addf %14, %16 : vector<64x256xf32>
    %18 = vector.extract_strided_slice %17 {offsets = [0, 0], sizes = [32, 256], strides = [1, 1]} : vector<64x256xf32> to vector<32x256xf32>
    %19 = vector.extract_strided_slice %17 {offsets = [32, 0], sizes = [32, 256], strides = [1, 1]} : vector<64x256xf32> to vector<32x256xf32>
    %20 = vector.extract_strided_slice %10 {offsets = [0, 0], sizes = [16, 256], strides = [1, 1]} : vector<32x256xf32> to vector<16x256xf32>
    %21 = arith.truncf %20 : vector<16x256xf32> to vector<16x256xbf16>
    %22 = vector.extract_strided_slice %18 {offsets = [0, 0], sizes = [16, 256], strides = [1, 1]} : vector<32x256xf32> to vector<16x256xf32>
    %23 = arith.truncf %22 : vector<16x256xf32> to vector<16x256xbf16>
    %24 = vector.extract_strided_slice %19 {offsets = [0, 0], sizes = [16, 256], strides = [1, 1]} : vector<32x256xf32> to vector<16x256xf32>
    %25 = arith.truncf %24 : vector<16x256xf32> to vector<16x256xbf16>
    %cst_12 = arith.constant dense<0.000000e+00> : vector<256x256xf32>
    %26 = tpu.matmul %21, %23, %cst_12 {dimension_numbers = #tpu.dot_dimension_numbers<[0], [0], [1], [1], [0, 1, 1, 1], [], []>} : vector<16x256xbf16>, vector<16x256xbf16>, vector<256x256xf32> -> vector<256x256xf32>
    %cst_13 = arith.constant dense<0xFF800000> : vector<256xf32>
    %27 = vector.multi_reduction <maximumf>, %26, %cst_13 [1] : vector<256x256xf32> to vector<256xf32>
    %28 = vector.shape_cast %27 : vector<256xf32> to vector<256x1xf32>
    %29 = vector.broadcast %28 : vector<256x1xf32> to vector<256x256xf32>
    %30 = arith.subf %26, %29 : vector<256x256xf32>
    %31 = math.exp %30 : vector<256x256xf32>
    %cst_14 = arith.constant dense<0.000000e+00> : vector<256xf32>
    %32 = vector.multi_reduction <add>, %31, %cst_14 [1] : vector<256x256xf32> to vector<256xf32>
    %33 = vector.shape_cast %32 : vector<256xf32> to vector<256x1xf32>
    %34 = tpu.reciprocal %33 {approx = true} : vector<256x1xf32> -> vector<256x1xf32>
    %35 = vector.broadcast %34 : vector<256x1xf32> to vector<256x256xf32>
    %36 = arith.mulf %31, %35 : vector<256x256xf32>
    %37 = arith.truncf %36 : vector<256x256xf32> to vector<256x256xbf16>
    %cst_15 = arith.constant dense<0.000000e+00> : vector<16x256xf32>
    %38 = tpu.matmul %25, %37, %cst_15 {dimension_numbers = #tpu.dot_dimension_numbers<[1], [1], [0], [0], [0, 0, 1, 0], [], []>} : vector<16x256xbf16>, vector<256x256xbf16>, vector<16x256xf32> -> vector<16x256xf32>
    %39 = vector.extract_strided_slice %10 {offsets = [16, 0], sizes = [16, 256], strides = [1, 1]} : vector<32x256xf32> to vector<16x256xf32>
    %40 = arith.truncf %39 : vector<16x256xf32> to vector<16x256xbf16>
    %41 = vector.extract_strided_slice %18 {offsets = [16, 0], sizes = [16, 256], strides = [1, 1]} : vector<32x256xf32> to vector<16x256xf32>
    %42 = arith.truncf %41 : vector<16x256xf32> to vector<16x256xbf16>
    %43 = vector.extract_strided_slice %19 {offsets = [16, 0], sizes = [16, 256], strides = [1, 1]} : vector<32x256xf32> to vector<16x256xf32>
    %44 = arith.truncf %43 : vector<16x256xf32> to vector<16x256xbf16>
    %cst_16 = arith.constant dense<0.000000e+00> : vector<256x256xf32>
    %45 = tpu.matmul %40, %42, %cst_16 {dimension_numbers = #tpu.dot_dimension_numbers<[0], [0], [1], [1], [0, 1, 1, 1], [], []>} : vector<16x256xbf16>, vector<16x256xbf16>, vector<256x256xf32> -> vector<256x256xf32>
    %cst_17 = arith.constant dense<0xFF800000> : vector<256xf32>
    %46 = vector.multi_reduction <maximumf>, %45, %cst_17 [1] : vector<256x256xf32> to vector<256xf32>
    %47 = vector.shape_cast %46 : vector<256xf32> to vector<256x1xf32>
    %48 = vector.broadcast %47 : vector<256x1xf32> to vector<256x256xf32>
    %49 = arith.subf %45, %48 : vector<256x256xf32>
    %50 = math.exp %49 : vector<256x256xf32>
    %cst_18 = arith.constant dense<0.000000e+00> : vector<256xf32>
    %51 = vector.multi_reduction <add>, %50, %cst_18 [1] : vector<256x256xf32> to vector<256xf32>
    %52 = vector.shape_cast %51 : vector<256xf32> to vector<256x1xf32>
    %53 = tpu.reciprocal %52 {approx = true} : vector<256x1xf32> -> vector<256x1xf32>
    %54 = vector.broadcast %53 : vector<256x1xf32> to vector<256x256xf32>
    %55 = arith.mulf %50, %54 : vector<256x256xf32>
    %56 = arith.truncf %55 : vector<256x256xf32> to vector<256x256xbf16>
    %cst_19 = arith.constant dense<0.000000e+00> : vector<16x256xf32>
    %57 = tpu.matmul %44, %56, %cst_19 {dimension_numbers = #tpu.dot_dimension_numbers<[1], [1], [0], [0], [0, 0, 1, 0], [], []>} : vector<16x256xbf16>, vector<256x256xbf16>, vector<16x256xf32> -> vector<16x256xf32>
    %58 = tpu.concatenate %38, %57 in 0 : vector<16x256xf32>, vector<16x256xf32> -> vector<32x256xf32>
    %c0_20 = arith.constant 0 : index
    %c0_21 = arith.constant 0 : index
    %59 = vector.load %arg6[%c0_20, %c0_21] : memref<32x32xf32, #tpu.memory_space<vmem>>, vector<32x32xf32>
    %60 = arith.truncf %59 : vector<32x32xf32> to vector<32x32xbf16>
    %61 = arith.truncf %58 : vector<32x256xf32> to vector<32x256xbf16>
    %cst_22 = arith.constant dense<0.000000e+00> : vector<32x256xf32>
    %62 = tpu.matmul %60, %61, %cst_22 {dimension_numbers = #tpu.dot_dimension_numbers<[1], [0], [0], [1], [0, 0, 1, 1], [], []>} : vector<32x32xbf16>, vector<32x256xbf16>, vector<32x256xf32> -> vector<32x256xf32>
    %c0_23 = arith.constant 0 : index
    %c0_24 = arith.constant 0 : index
    %63 = vector.load %arg7[%c0_23, %c0_24] : memref<32x1xf32, #tpu.memory_space<vmem>>, vector<32x1xf32>
    %64 = vector.broadcast %63 : vector<32x1xf32> to vector<32x256xf32>
    %65 = arith.addf %62, %64 : vector<32x256xf32>
    %c0_25 = arith.constant 0 : index
    %c0_26 = arith.constant 0 : index
    %c0_27 = arith.constant 0 : index
    %66 = vector.load %arg8[%c0_25, %c0_26, %c0_27] : memref<1x32x256xf32, #tpu.memory_space<vmem>>, vector<1x32x256xf32>
    %67 = vector.shape_cast %66 : vector<1x32x256xf32> to vector<32x256xf32>
    %68 = vector.shape_cast %65 : vector<32x256xf32> to vector<1x32x256xf32>
    tpu.vector_store %arg8[%c0_25, %c0_26, %c0_27], %68 {strides = array<i32>} : memref<1x32x256xf32, #tpu.memory_space<vmem>>, vector<1x32x256xf32>,
    return
  }
  func.func @transform_0(%arg0: i32) -> (i32, i32, i32) {
    %c0_i32 = arith.constant 0 : i32
    %c0_i32_0 = arith.constant 0 : i32
    %c0_i32_1 = arith.constant 0 : i32
    return %arg0, %c0_i32, %c0_i32_0 : i32, i32, i32
  }
  func.func @transform_1(%arg0: i32) -> (i32, i32) {
    %c0_i32 = arith.constant 0 : i32
    %c0_i32_0 = arith.constant 0 : i32
    %c0_i32_1 = arith.constant 0 : i32
    return %c0_i32, %c0_i32_0 : i32, i32
  }
  func.func @transform_2(%arg0: i32) -> (i32, i32) {
    %c0_i32 = arith.constant 0 : i32
    %c0_i32_0 = arith.constant 0 : i32
    %c0_i32_1 = arith.constant 0 : i32
    return %c0_i32, %c0_i32_0 : i32, i32
  }
  func.func @transform_3(%arg0: i32) -> (i32, i32) {
    %c0_i32 = arith.constant 0 : i32
    %c0_i32_0 = arith.constant 0 : i32
    %c0_i32_1 = arith.constant 0 : i32
    return %c0_i32, %c0_i32_0 : i32, i32
  }
  func.func @transform_4(%arg0: i32) -> (i32, i32) {
    %c0_i32 = arith.constant 0 : i32
    %c0_i32_0 = arith.constant 0 : i32
    %c0_i32_1 = arith.constant 0 : i32
    return %c0_i32, %c0_i32_0 : i32, i32
  }
  func.func @transform_5(%arg0: i32) -> (i32, i32) {
    %c0_i32 = arith.constant 0 : i32
    %c0_i32_0 = arith.constant 0 : i32
    %c0_i32_1 = arith.constant 0 : i32
    return %c0_i32, %c0_i32_0 : i32, i32
  }
  func.func @transform_6(%arg0: i32) -> (i32, i32) {
    %c0_i32 = arith.constant 0 : i32
    %c0_i32_0 = arith.constant 0 : i32
    %c0_i32_1 = arith.constant 0 : i32
    return %c0_i32, %c0_i32_0 : i32, i32
  }
  func.func @transform_7(%arg0: i32) -> (i32, i32, i32) {
    %c0_i32 = arith.constant 0 : i32
    %c0_i32_0 = arith.constant 0 : i32
    %c0_i32_1 = arith.constant 0 : i32
    return %arg0, %c0_i32, %c0_i32_0 : i32, i32, i32
  }
}

</mosaic_0001>

<llo_original>
// kernel: pyramid_attention_forward.1
$region0: #{pyramid_attention_forward.1}
  #allocation0 [shape = 'u32[]', space=smem, size = 0x4, offset = 0x4, fixed_abs, tag = 'smem constant byte address 0x4 - core index']
  #allocation1 [shape = 'u32[144,128]{1,0:T(1,128)}', space=vmem, size = 0x12000, scoped, tag = 'internal scratch']
  %s0 = inlined_call_operand.vmem [shape: f32[2,32,256], index: 0, kind: input, shape index: {}]
  %s1 = inlined_call_operand.vmem [shape: f32[32,32], index: 1, kind: input, shape index: {}]
  %s2 = inlined_call_operand.vmem [shape: f32[32,1], index: 2, kind: input, shape index: {}]
  %s3 = inlined_call_operand.vmem [shape: f32[64,32], index: 3, kind: input, shape index: {}]
  %s4 = inlined_call_operand.vmem [shape: f32[64,1], index: 4, kind: input, shape index: {}]
  %s5 = inlined_call_operand.vmem [shape: f32[32,32], index: 5, kind: input, shape index: {}]
  %s6 = inlined_call_operand.vmem [shape: f32[32,1], index: 6, kind: input, shape index: {}]
  %s7 = inlined_call_operand.vmem [shape: f32[2,32,256], index: 7, kind: output, shape index: {}]
  %s8 = sld [smem:[#allocation0]]
  $region61: #{pyramid_attention_forward.1} parent=0
    _
  %s10 = ssub.s32 1, %s8
  %s11 = scalar_select 0, %s10, %s8
  loop: start=0, step=1, limit=4
  $region2: #{pyramid_attention_forward.1} parent=0 // loop_pre_header
    _
  $region3: #{pyramid_attention_forward.1} parent=0 // loop_header
    %s13 = sphi 0, %s17
    %p14 = scmp.ge.s32.totalorder %s13, 4
    %s23 = sphi 0, %s25
    %s26 = sphi 0, %s23
    %s27 = sphi 0, %s26
    %s43 = sphi 0, %s27
    %s47 = sphi 0, %s47
    %s49 = sphi 0, %s47
    %s50 = sphi 0, %s49
    %s64 = sphi 0, %s50
    %s68 = sphi 0, %s68
    %s70 = sphi 0, %s68
    %s71 = sphi 0, %s70
    %s85 = sphi 0, %s71
    %s89 = sphi 0, %s89
    %s91 = sphi 0, %s89
    %s92 = sphi 0, %s91
    %s106 = sphi 0, %s92
    %s110 = sphi 0, %s110
    %s112 = sphi 0, %s110
    %s113 = sphi 0, %s112
    %s127 = sphi 0, %s113
    %s131 = sphi 0, %s131
    %s133 = sphi 0, %s131
    %s134 = sphi 0, %s133
    %s148 = sphi 0, %s134
    %s152 = sphi 0, %s152
    %s154 = sphi 0, %s152
    %s155 = sphi 0, %s154
    %s169 = sphi 0, %s155
    %s175 = sphi 0, %s177
    %s178 = sphi 0, %s175
    %s179 = sphi 0, %s178
    %s195 = sphi 0, %s179
  $region4: #{pyramid_attention_forward.1} parent=0 // loop_header_branch
    %16 = sbr.rel (%p14) target = $region8
  $region5: #{pyramid_attention_forward.1} parent=0 // loop_body
    %s18 = ssub.s32 %s13, 1
    %s19 = ssub.s32 %s13, 2
    %s20 = sadd.s32 %s13, 1
    %s21 = ssub.s32 %s13, %s20
    %p22 = scmp.eq.s32.totalorder %s21, 0
    %s24 = sadd.s32 %s23, 1
    %s25 = scalar_select %p22, %s23, %s24
    %p28 = pneg %p22
    %p29 = scmp.eq.s32.totalorder %s13, 1
    %p30 = por %p28, %p29
    %p31 = scmp.ne.s32.totalorder %s23, %s26
    %p32 = scmp.eq.s32.totalorder %s13, 0
    %p33 = por %p31, %p32
    %p34 = scmp.ne.s32.totalorder %s23, %s26
    %p35 = scmp.eq.s32.totalorder %s18, 1
    %p36 = por %p34, %p35
    %p37 = scmp.ne.s32.totalorder %s26, %s27
    %p38 = scmp.eq.s32.totalorder %s18, 0
    %p39 = por %p37, %p38
    %p40 = scmp.ne.s32.totalorder %s26, %s27
    %p41 = scmp.eq.s32.totalorder %s19, 1
    %p42 = por %p40, %p41
    %p44 = scmp.ne.s32.totalorder %s27, %s43
    %p45 = scmp.eq.s32.totalorder %s19, 0
    %p46 = por %p44, %p45
    %s48 = sadd.s32 %s47, 1
    %p51 = scmp.eq.s32.totalorder %s13, 1
    %p52 = scmp.ne.s32.totalorder %s47, %s49
    %p53 = scmp.eq.s32.totalorder %s13, 0
    %p54 = por %p52, %p53
    %p55 = scmp.ne.s32.totalorder %s47, %s49
    %p56 = scmp.eq.s32.totalorder %s18, 1
    %p57 = por %p55, %p56
    %p58 = scmp.ne.s32.totalorder %s49, %s50
    %p59 = scmp.eq.s32.totalorder %s18, 0
    %p60 = por %p58, %p59
    %p61 = scmp.ne.s32.totalorder %s49, %s50
    %p62 = scmp.eq.s32.totalorder %s19, 1
    %p63 = por %p61, %p62
    %p65 = scmp.ne.s32.totalorder %s50, %s64
    %p66 = scmp.eq.s32.totalorder %s19, 0
    %p67 = por %p65, %p66
    %s69 = sadd.s32 %s68, 1
    %p72 = scmp.eq.s32.totalorder %s13, 1
    %p73 = scmp.ne.s32.totalorder %s68, %s70
    %p74 = scmp.eq.s32.totalorder %s13, 0
    %p75 = por %p73, %p74
    %p76 = scmp.ne.s32.totalorder %s68, %s70
    %p77 = scmp.eq.s32.totalorder %s18, 1
    %p78 = por %p76, %p77
    %p79 = scmp.ne.s32.totalorder %s70, %s71
    %p80 = scmp.eq.s32.totalorder %s18, 0
    %p81 = por %p79, %p80
    %p82 = scmp.ne.s32.totalorder %s70, %s71
    %p83 = scmp.eq.s32.totalorder %s19, 1
    %p84 = por %p82, %p83
    %p86 = scmp.ne.s32.totalorder %s71, %s85
    %p87 = scmp.eq.s32.totalorder %s19, 0
    %p88 = por %p86, %p87
    %s90 = sadd.s32 %s89, 1
    %p93 = scmp.eq.s32.totalorder %s13, 1
    %p94 = scmp.ne.s32.totalorder %s89, %s91
    %p95 = scmp.eq.s32.totalorder %s13, 0
    %p96 = por %p94, %p95
    %p97 = scmp.ne.s32.totalorder %s89, %s91
    %p98 = scmp.eq.s32.totalorder %s18, 1
    %p99 = por %p97, %p98
    %p100 = scmp.ne.s32.totalorder %s91, %s92
    %p101 = scmp.eq.s32.totalorder %s18, 0
    %p102 = por %p100, %p101
    %p103 = scmp.ne.s32.totalorder %s91, %s92
    %p104 = scmp.eq.s32.totalorder %s19, 1
    %p105 = por %p103, %p104
    %p107 = scmp.ne.s32.totalorder %s92, %s106
    %p108 = scmp.eq.s32.totalorder %s19, 0
    %p109 = por %p107, %p108
    %s111 = sadd.s32 %s110, 1
    %p114 = scmp.eq.s32.totalorder %s13, 1
    %p115 = scmp.ne.s32.totalorder %s110, %s112
    %p116 = scmp.eq.s32.totalorder %s13, 0
    %p117 = por %p115, %p116
    %p118 = scmp.ne.s32.totalorder %s110, %s112
    %p119 = scmp.eq.s32.totalorder %s18, 1
    %p120 = por %p118, %p119
    %p121 = scmp.ne.s32.totalorder %s112, %s113
    %p122 = scmp.eq.s32.totalorder %s18, 0
    %p123 = por %p121, %p122
    %p124 = scmp.ne.s32.totalorder %s112, %s113
    %p125 = scmp.eq.s32.totalorder %s19, 1
    %p126 = por %p124, %p125
    %p128 = scmp.ne.s32.totalorder %s113, %s127
    %p129 = scmp.eq.s32.totalorder %s19, 0
    %p130 = por %p128, %p129
    %s132 = sadd.s32 %s131, 1
    %p135 = scmp.eq.s32.totalorder %s13, 1
    %p136 = scmp.ne.s32.totalorder %s131, %s133
    %p137 = scmp.eq.s32.totalorder %s13, 0
    %p138 = por %p136, %p137
    %p139 = scmp.ne.s32.totalorder %s131, %s133
    %p140 = scmp.eq.s32.totalorder %s18, 1
    %p141 = por %p139, %p140
    %p142 = scmp.ne.s32.totalorder %s133, %s134
    %p143 = scmp.eq.s32.totalorder %s18, 0
    %p144 = por %p142, %p143
    %p145 = scmp.ne.s32.totalorder %s133, %s134
    %p146 = scmp.eq.s32.totalorder %s19, 1
    %p147 = por %p145, %p146
    %p149 = scmp.ne.s32.totalorder %s134, %s148
    %p150 = scmp.eq.s32.totalorder %s19, 0
    %p151 = por %p149, %p150
    %s153 = sadd.s32 %s152, 1
    %p156 = scmp.eq.s32.totalorder %s13, 1
    %p157 = scmp.ne.s32.totalorder %s152, %s154
    %p158 = scmp.eq.s32.totalorder %s13, 0
    %p159 = por %p157, %p158
    %p160 = scmp.ne.s32.totalorder %s152, %s154
    %p161 = scmp.eq.s32.totalorder %s18, 1
    %p162 = por %p160, %p161
    %p163 = scmp.ne.s32.totalorder %s154, %s155
    %p164 = scmp.eq.s32.totalorder %s18, 0
    %p165 = por %p163, %p164
    %p166 = scmp.ne.s32.totalorder %s154, %s155
    %p167 = scmp.eq.s32.totalorder %s19, 1
    %p168 = por %p166, %p167
    %p170 = scmp.ne.s32.totalorder %s155, %s169
    %p171 = scmp.eq.s32.totalorder %s19, 0
    %p172 = por %p170, %p171
    %s173 = ssub.s32 %s13, %s20
    %p174 = scmp.eq.s32.totalorder %s173, 0
    %s176 = sadd.s32 %s175, 1
    %s177 = scalar_select %p174, %s175, %s176
    %p180 = pneg %p174
    %p181 = scmp.eq.s32.totalorder %s13, 1
    %p182 = por %p180, %p181
    %p183 = scmp.ne.s32.totalorder %s175, %s178
    %p184 = scmp.eq.s32.totalorder %s13, 0
    %p185 = por %p183, %p184
    %p186 = scmp.ne.s32.totalorder %s175, %s178
    %p187 = scmp.eq.s32.totalorder %s18, 1
    %p188 = por %p186, %p187
    %p189 = scmp.ne.s32.totalorder %s178, %s179
    %p190 = scmp.eq.s32.totalorder %s18, 0
    %p191 = por %p189, %p190
    %p192 = scmp.ne.s32.totalorder %s178, %s179
    %p193 = scmp.eq.s32.totalorder %s19, 1
    %p194 = por %p192, %p193
    %p196 = scmp.ne.s32.totalorder %s179, %s195
    %p197 = scmp.eq.s32.totalorder %s19, 0
    %p198 = por %p196, %p197
    %p199 = scmp.le.s32.totalorder 1, %s13
    %p200 = scmp.lt.s32.totalorder %s13, 3
    %p201 = pnand %p199, %p200
    %p202 = pneg %p201
    // Predicated region
    $region9: #{pyramid_attention_forward.1} parent=5 // pred_check
      _
    $region10: #{pyramid_attention_forward.1} parent=5 // pred_check_branch
      %204 = sbr.rel (%p201) target = $region12
    $region11: #{pyramid_attention_forward.1} parent=5 // pred_region
      %s205 = ssub.s32 %s13, 1
      // Predicated region
      $region13: #{pyramid_attention_forward.1} parent=11 // pred_check
        %p206 = pneg %p60
      $region14: #{pyramid_attention_forward.1} parent=11 // pred_check_branch
        %208 = sbr.rel (%p206) target = $region16
      $region15: #{pyramid_attention_forward.1} parent=11 // pred_region
        _
      $region16: #{pyramid_attention_forward.1} parent=11 // pred_fallthru
        _
      // Predicated region
      $region17: #{pyramid_attention_forward.1} parent=11 // pred_check
        %p209 = pneg %p81
      $region18: #{pyramid_attention_forward.1} parent=11 // pred_check_branch
        %211 = sbr.rel (%p209) target = $region20
      $region19: #{pyramid_attention_forward.1} parent=11 // pred_region
        _
      $region20: #{pyramid_attention_forward.1} parent=11 // pred_fallthru
        _
      // Predicated region
      $region21: #{pyramid_attention_forward.1} parent=11 // pred_check
        %p212 = pneg %p102
      $region22: #{pyramid_attention_forward.1} parent=11 // pred_check_branch
        %214 = sbr.rel (%p212) target = $region24
      $region23: #{pyramid_attention_forward.1} parent=11 // pred_region
        _
      $region24: #{pyramid_attention_forward.1} parent=11 // pred_fallthru
        _
      // Predicated region
      $region25: #{pyramid_attention_forward.1} parent=11 // pred_check
        %p215 = pneg %p123
      $region26: #{pyramid_attention_forward.1} parent=11 // pred_check_branch
        %217 = sbr.rel (%p215) target = $region28
      $region27: #{pyramid_attention_forward.1} parent=11 // pred_region
        _
      $region28: #{pyramid_attention_forward.1} parent=11 // pred_fallthru
        _
      // Predicated region
      $region29: #{pyramid_attention_forward.1} parent=11 // pred_check
        %p218 = pneg %p144
      $region30: #{pyramid_attention_forward.1} parent=11 // pred_check_branch
        %220 = sbr.rel (%p218) target = $region32
      $region31: #{pyramid_attention_forward.1} parent=11 // pred_region
        _
      $region32: #{pyramid_attention_forward.1} parent=11 // pred_fallthru
        _
      // Predicated region
      $region33: #{pyramid_attention_forward.1} parent=11 // pred_check
        %p221 = pneg %p165
      $region34: #{pyramid_attention_forward.1} parent=11 // pred_check_branch
        %223 = sbr.rel (%p221) target = $region36
      $region35: #{pyramid_attention_forward.1} parent=11 // pred_region
        _
      $region36: #{pyramid_attention_forward.1} parent=11 // pred_fallthru
        _
    $region12: #{pyramid_attention_forward.1} parent=5 // pred_fallthru
      _
    %p224 = scmp.lt.s32.totalorder %s13, 2
    // Predicated region
    $region37: #{pyramid_attention_forward.1} parent=5 // pred_check
      %p225 = pneg %p224
    $region38: #{pyramid_attention_forward.1} parent=5 // pred_check_branch
      %227 = sbr.rel (%p225) target = $region40
    $region39: #{pyramid_attention_forward.1} parent=5 // pred_region
      // Predicated region
      $region41: #{pyramid_attention_forward.1} parent=39 // pred_check
        %p228 = pneg %p33
      $region42: #{pyramid_attention_forward.1} parent=39 // pred_check_branch
        %230 = sbr.rel (%p228) target = $region44
      $region43: #{pyramid_attention_forward.1} parent=39 // pred_region
        %p231 = scmp.lt.s32.totalorder %s13, 1
        %s232 = scalar_select %p231, %s13, 1
        %s233 = smul.addr %s232, 8
        %s234 = smul.addr %s233, 8
        %s235 = scalar_lea.vmem %s0, %s234
      $region44: #{pyramid_attention_forward.1} parent=39 // pred_fallthru
        _
    $region40: #{pyramid_attention_forward.1} parent=5 // pred_fallthru
      _
    %p236 = scmp.le.s32.totalorder 1, %s13
    %p237 = scmp.lt.s32.totalorder %s13, 3
    %p238 = pnand %p236, %p237
    %p239 = pneg %p238
    // Predicated region
    $region45: #{pyramid_attention_forward.1} parent=5 // pred_check
      _
    $region46: #{pyramid_attention_forward.1} parent=5 // pred_check_branch
      %241 = sbr.rel (%p238) target = $region48
    $region47: #{pyramid_attention_forward.1} parent=5 // pred_region
      %s242 = ssub.s32 %s13, 1
      %p243 = scmp.lt.s32.totalorder %s18, 1
      %s244 = scalar_select %p243, %s18, 1
      %s245 = smul.addr %s244, 8
      %s246 = smul.addr %s245, 8
      %s247 = scalar_lea.vmem %s0, %s246
      %p248 = pneg %p39
      %p249 = pneg %p36
      %p250 = pneg %p60
      %p251 = pneg %p57
      %p252 = pneg %p81
      %p253 = pneg %p78
      %p254 = pneg %p102
      %p255 = pneg %p99
      %p256 = pneg %p123
      %p257 = pneg %p120
      %p258 = pneg %p144
      %p259 = pneg %p141
      %p260 = pneg %p165
      %p261 = pneg %p162
      %p262 = pneg %p191
      %p263 = pneg %p188
      %p264 = scmp.lt.s32.totalorder %s18, 1
      %s265 = scalar_select %p264, %s18, 1
      %s266 = smul.addr %s265, 8
      %s267 = smul.addr %s266, 8
      %s268 = scalar_lea.vmem %s7, %s267
      %p269 = scmp.lt.s32.totalorder %s18, 1
      %s270 = scalar_select %p269, %s18, 1
      %s271 = smul.addr %s270, 8
      %s272 = smul.addr %s271, 8
      %s273 = scalar_lea.vmem %s0, %s272
      %p274 = scmp.lt.s32.totalorder %s18, 1
      %s275 = scalar_select %p274, %s18, 1
      %s276 = smul.addr %s275, 8
      %s277 = smul.addr %s276, 8
      %s278 = scalar_lea.vmem %s7, %s277
      %v280 = vld [vmem:[%s273] sm:$0xff]
      %v281 = vld [vmem:[%s273 + $0x8] sm:$0xff]
      %v282 = vld [vmem:[%s273 + $0x10] sm:$0xff]
      %v283 = vld [vmem:[%s273 + $0x18] sm:$0xff]
      %v284 = vld [vmem:[%s273 + $0x20] sm:$0xff]
      %v285 = vld [vmem:[%s273 + $0x28] sm:$0xff]
      %v286 = vld [vmem:[%s273 + $0x30] sm:$0xff]
      %v287 = vld [vmem:[%s273 + $0x38] sm:$0xff]
      %v288 = vld [vmem:[%s1] sm:$0xff]
      %v289 = vld [vmem:[%s1 + $0x8] sm:$0xff]
      %v290 = vld [vmem:[%s1 + $0x10] sm:$0xff]
      %v291 = vld [vmem:[%s1 + $0x18] sm:$0xff]
      %v292 = vpack.c.bf16 %v289, %v288
      %v293 = vpack.c.bf16 %v291, %v290
      %v294 = vpack.c.bf16 %v282, %v280
      %v295 = vpack.c.bf16 %v283, %v281
      %v296 = vpack.c.bf16 %v286, %v284
      %v297 = vpack.c.bf16 %v287, %v285
      %v298 = vld [vmem:[%s2] sm:$0xff]
      %v299 = vld [vmem:[%s2 + $0x8] sm:$0xff]
      %v300 = vld [vmem:[%s2 + $0x10] sm:$0xff]
      %v301 = vld [vmem:[%s2 + $0x18] sm:$0xff]
      %303 = vset.pattern.permute.xlu0 0
      %304 = vperm.xlu0 %303, %v298
      %v305 = vpop.permute.xlu0 %304
      %308 = vset.pattern.permute.xlu0 0
      %309 = vperm.xlu0 %308, %v299
      %v310 = vpop.permute.xlu0 %309
      %313 = vset.pattern.permute.xlu0 0
      %314 = vperm.xlu0 %313, %v300
      %v315 = vpop.permute.xlu0 %314
      %318 = vset.pattern.permute.xlu0 0
      %319 = vperm.xlu0 %318, %v301
      %v320 = vpop.permute.xlu0 %319
      %vm322 = vcmask 261120
      %v324 = vsel %vm322, %v292, 0
      %v327 = vsel %vm322, %v293, 0
      %329 = vmatprep.subr.bf16.mxu0 %v295
      %330 = vmatpush1.bf16.msra.mxu0 %v294
      %331 = vmatprep.subr.bf16.mxu0 %v297
      %332 = vmatpush1.bf16.msra.mxu0 %v296
      %333 = vmatprep.subr.bf16.mxu0 0
      %334 = vmatpush1.bf16.msra.mxu0 0
      %335 = vmatprep.subr.bf16.mxu0 0
      %336 = vmatpush1.bf16.msra.mxu0 0
      %337 = vmatprep.subr.bf16.mxu0 0
      %338 = vmatpush1.bf16.msra.mxu0 0
      %339 = vmatprep.subr.bf16.mxu0 0
      %340 = vmatpush1.bf16.msra.mxu0 0
      %341 = vmatprep.subr.bf16.mxu0 0
      %342 = vmatpush1.bf16.msra.mxu0 0
      %343 = vmatprep.subr.bf16.mxu0 0
      %344 = vmatpush1.bf16.msra.mxu0 0
      %345 = vmatprep.subr.bf16.mxu0 0
      %346 = vmatpush1.bf16.msra.mxu0 0
      %347 = vmatprep.subr.bf16.mxu0 0
      %348 = vmatpush1.bf16.msra.mxu0 0
      %349 = vmatprep.subr.bf16.mxu0 0
      %350 = vmatpush1.bf16.msra.mxu0 0
      %351 = vmatprep.subr.bf16.mxu0 0
      %352 = vmatpush1.bf16.msra.mxu0 0
      %353 = vmatprep.subr.bf16.mxu0 0
      %354 = vmatpush1.bf16.msra.mxu0 0
      %355 = vmatprep.subr.bf16.mxu0 0
      %356 = vmatpush1.bf16.msra.mxu0 0
      %357 = vmatprep.subr.bf16.mxu0 0
      %358 = vmatpush1.bf16.msra.mxu0 0
      %359 = vmatprep.subr.bf16.mxu0 0
      %360 = vmatpush1.bf16.msra.mxu0 0
      %361 = vmatprep.mubr.bf16.mxu0 0
      %362 = vmatmul.mubr.bf16.gmra.mrb[0].mxu0 %v324
      %v363 = vpop.f32.mrb[0].mxu0
      %v364 = vadd.f32 %v305, %v363
      %v365 = vpop.f32.mrb[0].mxu0
      %v366 = vadd.f32 %v305, %v365
      %v367 = vpop.f32.mrb[0].mxu0
      %v368 = vadd.f32 %v310, %v367
      %v369 = vpop.f32.mrb[0].mxu0
      %v370 = vadd.f32 %v310, %v369
      %371 = vmatprep.mubr.bf16.mxu0 0
      %372 = vmatmul.mubr.bf16.gmra.mrb[0].mxu0 %v327
      %v373 = vpop.f32.mrb[0].mxu0
      %v374 = vadd.f32 %v315, %v373
      %v375 = vpop.f32.mrb[0].mxu0
      %v376 = vadd.f32 %v315, %v375
      %v377 = vpop.f32.mrb[0].mxu0
      %v378 = vadd.f32 %v320, %v377
      %v379 = vpop.f32.mrb[0].mxu0
      %v380 = vadd.f32 %v320, %v379
      %381 = vdwg.mxu0
      %v382 = vmul.f32 %v364, 0.25
      %v383 = vmul.f32 %v366, 0.25
      %v384 = vmul.f32 %v368, 0.25
      %v385 = vmul.f32 %v370, 0.25
      %v386 = vmul.f32 %v374, 0.25
      %v387 = vmul.f32 %v376, 0.25
      %v388 = vmul.f32 %v378, 0.25
      %v389 = vmul.f32 %v380, 0.25
      %v390 = vld [vmem:[%s3] sm:$0xff]
      %v391 = vld [vmem:[%s3 + $0x8] sm:$0xff]
      %v392 = vld [vmem:[%s3 + $0x10] sm:$0xff]
      %v393 = vld [vmem:[%s3 + $0x18] sm:$0xff]
      %v394 = vld [vmem:[%s3 + $0x20] sm:$0xff]
      %v395 = vld [vmem:[%s3 + $0x28] sm:$0xff]
      %v396 = vld [vmem:[%s3 + $0x30] sm:$0xff]
      %v397 = vld [vmem:[%s3 + $0x38] sm:$0xff]
      %v398 = vpack.c.bf16 %v391, %v390
      %v399 = vpack.c.bf16 %v393, %v392
      %v400 = vpack.c.bf16 %v395, %v394
      %v401 = vpack.c.bf16 %v397, %v396
      %v402 = vld [vmem:[%s4] sm:$0xff]
      %v403 = vld [vmem:[%s4 + $0x8] sm:$0xff]
      %v404 = vld [vmem:[%s4 + $0x10] sm:$0xff]
      %v405 = vld [vmem:[%s4 + $0x18] sm:$0xff]
      %v406 = vld [vmem:[%s4 + $0x20] sm:$0xff]
      %v407 = vld [vmem:[%s4 + $0x28] sm:$0xff]
      %v408 = vld [vmem:[%s4 + $0x30] sm:$0xff]
      %v409 = vld [vmem:[%s4 + $0x38] sm:$0xff]
      %411 = vset.pattern.permute.xlu0 0
      %412 = vperm.xlu0 %411, %v402
      %v413 = vpop.permute.xlu0 %412
      %416 = vset.pattern.permute.xlu0 0
      %417 = vperm.xlu0 %416, %v403
      %v418 = vpop.permute.xlu0 %417
      %421 = vset.pattern.permute.xlu0 0
      %422 = vperm.xlu0 %421, %v404
      %v423 = vpop.permute.xlu0 %422
      %426 = vset.pattern.permute.xlu0 0
      %427 = vperm.xlu0 %426, %v405
      %v428 = vpop.permute.xlu0 %427
      %431 = vset.pattern.permute.xlu0 0
      %432 = vperm.xlu0 %431, %v406
      %v433 = vpop.permute.xlu0 %432
      %436 = vset.pattern.permute.xlu0 0
      %437 = vperm.xlu0 %436, %v407
      %v438 = vpop.permute.xlu0 %437
      %441 = vset.pattern.permute.xlu0 0
      %442 = vperm.xlu0 %441, %v408
      %v443 = vpop.permute.xlu0 %442
      %446 = vset.pattern.permute.xlu0 0
      %447 = vperm.xlu0 %446, %v409
      %v448 = vpop.permute.xlu0 %447
      %v451 = vsel %vm322, %v398, 0
      %v454 = vsel %vm322, %v399, 0
      %v457 = vsel %vm322, %v400, 0
      %v460 = vsel %vm322, %v401, 0
      %462 = vmatprep.subr.bf16.mxu0 %v295
      %463 = vmatpush1.bf16.msra.mxu0 %v294
      %464 = vmatprep.subr.bf16.mxu0 %v297
      %465 = vmatpush1.bf16.msra.mxu0 %v296
      %466 = vmatprep.subr.bf16.mxu0 0
      %467 = vmatpush1.bf16.msra.mxu0 0
      %468 = vmatprep.subr.bf16.mxu0 0
      %469 = vmatpush1.bf16.msra.mxu0 0
      %470 = vmatprep.subr.bf16.mxu0 0
      %471 = vmatpush1.bf16.msra.mxu0 0
      %472 = vmatprep.subr.bf16.mxu0 0
      %473 = vmatpush1.bf16.msra.mxu0 0
      %474 = vmatprep.subr.bf16.mxu0 0
      %475 = vmatpush1.bf16.msra.mxu0 0
      %476 = vmatprep.subr.bf16.mxu0 0
      %477 = vmatpush1.bf16.msra.mxu0 0
      %478 = vmatprep.subr.bf16.mxu0 0
      %479 = vmatpush1.bf16.msra.mxu0 0
      %480 = vmatprep.subr.bf16.mxu0 0
      %481 = vmatpush1.bf16.msra.mxu0 0
      %482 = vmatprep.subr.bf16.mxu0 0
      %483 = vmatpush1.bf16.msra.mxu0 0
      %484 = vmatprep.subr.bf16.mxu0 0
      %485 = vmatpush1.bf16.msra.mxu0 0
      %486 = vmatprep.subr.bf16.mxu0 0
      %487 = vmatpush1.bf16.msra.mxu0 0
      %488 = vmatprep.subr.bf16.mxu0 0
      %489 = vmatpush1.bf16.msra.mxu0 0
      %490 = vmatprep.subr.bf16.mxu0 0
      %491 = vmatpush1.bf16.msra.mxu0 0
      %492 = vmatprep.subr.bf16.mxu0 0
      %493 = vmatpush1.bf16.msra.mxu0 0
      %494 = vmatprep.mubr.bf16.mxu0 0
      %495 = vmatmul.mubr.bf16.gmra.mrb[0].mxu0 %v451
      %v496 = vpop.f32.mrb[0].mxu0
      %v497 = vadd.f32 %v413, %v496
      %v498 = vpop.f32.mrb[0].mxu0
      %v499 = vadd.f32 %v413, %v498
      %v500 = vpop.f32.mrb[0].mxu0
      %v501 = vadd.f32 %v418, %v500
      %v502 = vpop.f32.mrb[0].mxu0
      %v503 = vadd.f32 %v418, %v502
      %504 = vmatprep.mubr.bf16.mxu0 0
      %505 = vmatmul.mubr.bf16.gmra.mrb[0].mxu0 %v454
      %v506 = vpop.f32.mrb[0].mxu0
      %v507 = vadd.f32 %v423, %v506
      %v508 = vpop.f32.mrb[0].mxu0
      %v509 = vadd.f32 %v423, %v508
      %v510 = vpop.f32.mrb[0].mxu0
      %v511 = vadd.f32 %v428, %v510
      %v512 = vpop.f32.mrb[0].mxu0
      %v513 = vadd.f32 %v428, %v512
      %514 = vmatprep.mubr.bf16.mxu0 0
      %515 = vmatmul.mubr.bf16.gmra.mrb[0].mxu0 %v457
      %v516 = vpop.f32.mrb[0].mxu0
      %v517 = vadd.f32 %v433, %v516
      %v518 = vpop.f32.mrb[0].mxu0
      %v519 = vadd.f32 %v433, %v518
      %v520 = vpop.f32.mrb[0].mxu0
      %v521 = vadd.f32 %v438, %v520
      %v522 = vpop.f32.mrb[0].mxu0
      %v523 = vadd.f32 %v438, %v522
      %524 = vmatprep.mubr.bf16.mxu0 0
      %525 = vmatmul.mubr.bf16.gmra.mrb[0].mxu0 %v460
      %v526 = vpop.f32.mrb[0].mxu0
      %v527 = vadd.f32 %v443, %v526
      %v528 = vpop.f32.mrb[0].mxu0
      %v529 = vadd.f32 %v443, %v528
      %v530 = vpop.f32.mrb[0].mxu0
      %v531 = vadd.f32 %v448, %v530
      %v532 = vpop.f32.mrb[0].mxu0
      %v533 = vadd.f32 %v448, %v532
      %534 = vdwg.mxu0
      %v535 = vpack.c.bf16 %v384, %v382
      %v536 = vpack.c.bf16 %v385, %v383
      %v537 = vpack.c.bf16 %v501, %v497
      %v538 = vpack.c.bf16 %v503, %v499
      %v539 = vpack.c.bf16 %v521, %v517
      %v540 = vpack.c.bf16 %v523, %v519
      %541 = vxpose.xlu0.c.b16.start [1/8] %v535, 128
      %542 = vxpose.xlu0.c.b16.cont [2/8] 0, 128
      %543 = vxpose.xlu0.c.b16.cont [3/8] 0, 128
      %544 = vxpose.xlu0.c.b16.cont [4/8] 0, 128
      %545 = vxpose.xlu0.c.b16.cont [5/8] 0, 128
      %546 = vxpose.xlu0.c.b16.cont [6/8] 0, 128
      %547 = vxpose.xlu0.c.b16.cont [7/8] 0, 128
      %548 = vxpose.xlu0.c.b16.end [8/8] 0, 128
      %v549 = vpop.trf.xlu0
      %v550 = vpop.trf.xlu0
      %v551 = vpop.trf.xlu0
      %v552 = vpop.trf.xlu0
      %v553 = vpop.trf.xlu0
      %v554 = vpop.trf.xlu0
      %v555 = vpop.trf.xlu0
      %v556 = vpop.trf.xlu0
      %557 = vxpose.xlu0.c.b16.start [1/8] %v536, 128
      %558 = vxpose.xlu0.c.b16.cont [2/8] 0, 128
      %559 = vxpose.xlu0.c.b16.cont [3/8] 0, 128
      %560 = vxpose.xlu0.c.b16.cont [4/8] 0, 128
      %561 = vxpose.xlu0.c.b16.cont [5/8] 0, 128
      %562 = vxpose.xlu0.c.b16.cont [6/8] 0, 128
      %563 = vxpose.xlu0.c.b16.cont [7/8] 0, 128
      %564 = vxpose.xlu0.c.b16.end [8/8] 0, 128
      %v565 = vpop.trf.xlu0
      %v566 = vpop.trf.xlu0
      %v567 = vpop.trf.xlu0
      %v568 = vpop.trf.xlu0
      %v569 = vpop.trf.xlu0
      %v570 = vpop.trf.xlu0
      %v571 = vpop.trf.xlu0
      %v572 = vpop.trf.xlu0
      %vm573 = vcmask 130048
      %v575 = vsel %vm573, %v549, 0
      %v578 = vsel %vm573, %v550, 0
      %v581 = vsel %vm573, %v551, 0
      %v584 = vsel %vm573, %v552, 0
      %v587 = vsel %vm573, %v553, 0
      %v590 = vsel %vm573, %v554, 0
      %v593 = vsel %vm573, %v555, 0
      %v596 = vsel %vm573, %v556, 0
      %v599 = vsel %vm573, %v565, 0
      %v602 = vsel %vm573, %v566, 0
      %v605 = vsel %vm573, %v567, 0
      %v608 = vsel %vm573, %v568, 0
      %v611 = vsel %vm573, %v569, 0
      %v614 = vsel %vm573, %v570, 0
      %v617 = vsel %vm573, %v571, 0
      %v620 = vsel %vm573, %v572, 0
      %622 = vmatprep.subr.bf16.mxu0 %v538
      %623 = vmatpush1.bf16.msra.mxu0 %v537
      %624 = vmatprep.subr.bf16.mxu0 0
      %625 = vmatpush1.bf16.msra.mxu0 0
      %626 = vmatprep.subr.bf16.mxu0 0
      %627 = vmatpush1.bf16.msra.mxu0 0
      %628 = vmatprep.subr.bf16.mxu0 0
      %629 = vmatpush1.bf16.msra.mxu0 0
      %630 = vmatprep.subr.bf16.mxu0 0
      %631 = vmatpush1.bf16.msra.mxu0 0
      %632 = vmatprep.subr.bf16.mxu0 0
      %633 = vmatpush1.bf16.msra.mxu0 0
      %634 = vmatprep.subr.bf16.mxu0 0
      %635 = vmatpush1.bf16.msra.mxu0 0
      %636 = vmatprep.subr.bf16.mxu0 0
      %637 = vmatpush1.bf16.msra.mxu0 0
      %638 = vmatprep.subr.bf16.mxu0 0
      %639 = vmatpush1.bf16.msra.mxu0 0
      %640 = vmatprep.subr.bf16.mxu0 0
      %641 = vmatpush1.bf16.msra.mxu0 0
      %642 = vmatprep.subr.bf16.mxu0 0
      %643 = vmatpush1.bf16.msra.mxu0 0
      %644 = vmatprep.subr.bf16.mxu0 0
      %645 = vmatpush1.bf16.msra.mxu0 0
      %646 = vmatprep.subr.bf16.mxu0 0
      %647 = vmatpush1.bf16.msra.mxu0 0
      %648 = vmatprep.subr.bf16.mxu0 0
      %649 = vmatpush1.bf16.msra.mxu0 0
      %650 = vmatprep.subr.bf16.mxu0 0
      %651 = vmatpush1.bf16.msra.mxu0 0
      %652 = vmatprep.subr.bf16.mxu0 0
      %653 = vmatpush1.bf16.msra.mxu0 0
      %654 = vmatprep.mubr.bf16.mxu0 0
      %655 = vmatmul.mubr.bf16.gmra.mrb[0].mxu0 %v575
      %v656 = vpop.f32.mrb[0].mxu0
      %v657 = vadd.f32 0.0, %v656
      %v658 = vpop.f32.mrb[0].mxu0
      %v659 = vadd.f32 0.0, %v658
      %v660 = vpop.f32.mrb[0].mxu0
      %v661 = vadd.f32 0.0, %v660
      %v662 = vpop.f32.mrb[0].mxu0
      %v663 = vadd.f32 0.0, %v662
      %664 = vmatprep.mubr.bf16.mxu0 0
      %665 = vmatmul.mubr.bf16.gmra.mrb[0].mxu0 %v578
      %v666 = vpop.f32.mrb[0].mxu0
      %v667 = vadd.f32 0.0, %v666
      %v668 = vpop.f32.mrb[0].mxu0
      %v669 = vadd.f32 0.0, %v668
      %v670 = vpop.f32.mrb[0].mxu0
      %v671 = vadd.f32 0.0, %v670
      %v672 = vpop.f32.mrb[0].mxu0
      %v673 = vadd.f32 0.0, %v672
      %674 = vmatprep.mubr.bf16.mxu0 0
      %675 = vmatmul.mubr.bf16.gmra.mrb[0].mxu0 %v581
      %v676 = vpop.f32.mrb[0].mxu0
      %v677 = vadd.f32 0.0, %v676
      %v678 = vpop.f32.mrb[0].mxu0
      %v679 = vadd.f32 0.0, %v678
      %v680 = vpop.f32.mrb[0].mxu0
      %v681 = vadd.f32 0.0, %v680
      %v682 = vpop.f32.mrb[0].mxu0
      %v683 = vadd.f32 0.0, %v682
      %684 = vmatprep.mubr.bf16.mxu0 0
      %685 = vmatmul.mubr.bf16.gmra.mrb[0].mxu0 %v584
      %v686 = vpop.f32.mrb[0].mxu0
      %v687 = vadd.f32 0.0, %v686
      %v688 = vpop.f32.mrb[0].mxu0
      %v689 = vadd.f32 0.0, %v688
      %v690 = vpop.f32.mrb[0].mxu0
      %v691 = vadd.f32 0.0, %v690
      %v692 = vpop.f32.mrb[0].mxu0
      %v693 = vadd.f32 0.0, %v692
      %694 = vmatprep.mubr.bf16.mxu0 0
      %695 = vmatmul.mubr.bf16.gmra.mrb[0].mxu0 %v587
      %v696 = vpop.f32.mrb[0].mxu0
      %v697 = vadd.f32 0.0, %v696
      %v698 = vpop.f32.mrb[0].mxu0
      %v699 = vadd.f32 0.0, %v698
      %v700 = vpop.f32.mrb[0].mxu0
      %v701 = vadd.f32 0.0, %v700
      %v702 = vpop.f32.mrb[0].mxu0
      %v703 = vadd.f32 0.0, %v702
      %704 = vmatprep.mubr.bf16.mxu0 0
      %705 = vmatmul.mubr.bf16.gmra.mrb[0].mxu0 %v590
      %v706 = vpop.f32.mrb[0].mxu0
      %v707 = vadd.f32 0.0, %v706
      %v708 = vpop.f32.mrb[0].mxu0
      %v709 = vadd.f32 0.0, %v708
      %v710 = vpop.f32.mrb[0].mxu0
      %v711 = vadd.f32 0.0, %v710
      %v712 = vpop.f32.mrb[0].mxu0
      %v713 = vadd.f32 0.0, %v712
      %714 = vmatprep.mubr.bf16.mxu0 0
      %715 = vmatmul.mubr.bf16.gmra.mrb[0].mxu0 %v593
      %v716 = vpop.f32.mrb[0].mxu0
      %v717 = vadd.f32 0.0, %v716
      %v718 = vpop.f32.mrb[0].mxu0
      %v719 = vadd.f32 0.0, %v718
      %v720 = vpop.f32.mrb[0].mxu0
      %v721 = vadd.f32 0.0, %v720
      %v722 = vpop.f32.mrb[0].mxu0
      %v723 = vadd.f32 0.0, %v722
      %724 = vmatprep.mubr.bf16.mxu0 0
      %725 = vmatmul.mubr.bf16.gmra.mrb[0].mxu0 %v596
      %v726 = vpop.f32.mrb[0].mxu0
      %v727 = vadd.f32 0.0, %v726
      %v728 = vpop.f32.mrb[0].mxu0
      %v729 = vadd.f32 0.0, %v728
      %v730 = vpop.f32.mrb[0].mxu0
      %v731 = vadd.f32 0.0, %v730
      %v732 = vpop.f32.mrb[0].mxu0
      %v733 = vadd.f32 0.0, %v732
      %734 = vmatprep.mubr.bf16.mxu0 0
      %735 = vmatmul.mubr.bf16.gmra.mrb[0].mxu0 %v599
      %v736 = vpop.f32.mrb[0].mxu0
      %v737 = vadd.f32 0.0, %v736
      %v738 = vpop.f32.mrb[0].mxu0
      %v739 = vadd.f32 0.0, %v738
      %v740 = vpop.f32.mrb[0].mxu0
      %v741 = vadd.f32 0.0, %v740
      %v742 = vpop.f32.mrb[0].mxu0
      %v743 = vadd.f32 0.0, %v742
      %744 = vmatprep.mubr.bf16.mxu0 0
      %745 = vmatmul.mubr.bf16.gmra.mrb[0].mxu0 %v602
      %v746 = vpop.f32.mrb[0].mxu0
      %v747 = vadd.f32 0.0, %v746
      %v748 = vpop.f32.mrb[0].mxu0
      %v749 = vadd.f32 0.0, %v748
      %v750 = vpop.f32.mrb[0].mxu0
      %v751 = vadd.f32 0.0, %v750
      %v752 = vpop.f32.mrb[0].mxu0
      %v753 = vadd.f32 0.0, %v752
      %754 = vmatprep.mubr.bf16.mxu0 0
      %755 = vmatmul.mubr.bf16.gmra.mrb[0].mxu0 %v605
      %v756 = vpop.f32.mrb[0].mxu0
      %v757 = vadd.f32 0.0, %v756
      %v758 = vpop.f32.mrb[0].mxu0
      %v759 = vadd.f32 0.0, %v758
      %v760 = vpop.f32.mrb[0].mxu0
      %v761 = vadd.f32 0.0, %v760
      %v762 = vpop.f32.mrb[0].mxu0
      %v763 = vadd.f32 0.0, %v762
      %764 = vmatprep.mubr.bf16.mxu0 0
      %765 = vmatmul.mubr.bf16.gmra.mrb[0].mxu0 %v608
      %v766 = vpop.f32.mrb[0].mxu0
      %v767 = vadd.f32 0.0, %v766
      %v768 = vpop.f32.mrb[0].mxu0
      %v769 = vadd.f32 0.0, %v768
      %v770 = vpop.f32.mrb[0].mxu0
      %v771 = vadd.f32 0.0, %v770
      %v772 = vpop.f32.mrb[0].mxu0
      %v773 = vadd.f32 0.0, %v772
      %774 = vmatprep.mubr.bf16.mxu0 0
      %775 = vmatmul.mubr.bf16.gmra.mrb[0].mxu0 %v611
      %v776 = vpop.f32.mrb[0].mxu0
      %v777 = vadd.f32 0.0, %v776
      %v778 = vpop.f32.mrb[0].mxu0
      %v779 = vadd.f32 0.0, %v778
      %v780 = vpop.f32.mrb[0].mxu0
      %v781 = vadd.f32 0.0, %v780
      %v782 = vpop.f32.mrb[0].mxu0
      %v783 = vadd.f32 0.0, %v782
      %784 = vmatprep.mubr.bf16.mxu0 0
      %785 = vmatmul.mubr.bf16.gmra.mrb[0].mxu0 %v614
      %v786 = vpop.f32.mrb[0].mxu0
      %v787 = vadd.f32 0.0, %v786
      %v788 = vpop.f32.mrb[0].mxu0
      %v789 = vadd.f32 0.0, %v788
      %v790 = vpop.f32.mrb[0].mxu0
      %v791 = vadd.f32 0.0, %v790
      %v792 = vpop.f32.mrb[0].mxu0
      %v793 = vadd.f32 0.0, %v792
      %794 = vmatprep.mubr.bf16.mxu0 0
      %795 = vmatmul.mubr.bf16.gmra.mrb[0].mxu0 %v617
      %v796 = vpop.f32.mrb[0].mxu0
      %v797 = vadd.f32 0.0, %v796
      %v798 = vpop.f32.mrb[0].mxu0
      %v799 = vadd.f32 0.0, %v798
      %v800 = vpop.f32.mrb[0].mxu0
      %v801 = vadd.f32 0.0, %v800
      %v802 = vpop.f32.mrb[0].mxu0
      %v803 = vadd.f32 0.0, %v802
      %804 = vmatprep.mubr.bf16.mxu0 0
      %805 = vmatmul.mubr.bf16.gmra.mrb[0].mxu0 %v620
      %v806 = vpop.f32.mrb[0].mxu0
      %v807 = vadd.f32 0.0, %v806
      %v808 = vpop.f32.mrb[0].mxu0
      %v809 = vadd.f32 0.0, %v808
      %v810 = vpop.f32.mrb[0].mxu0
      %v811 = vadd.f32 0.0, %v810
      %v812 = vpop.f32.mrb[0].mxu0
      %v813 = vadd.f32 0.0, %v812
      %814 = vdwg.mxu0
      %v815 = vmax.f32 %v657, %v659
      %816 = vmax.xlane.f32.xlu0 %v815
      %v817 = vpop.xlane.xlu0 %816
      %v818 = vmax.f32 %v661, %v663
      %819 = vmax.xlane.f32.xlu0 %v818
      %v820 = vpop.xlane.xlu0 %819
      %v821 = vmax.f32 %v667, %v669
      %822 = vmax.xlane.f32.xlu0 %v821
      %v823 = vpop.xlane.xlu0 %822
      %v824 = vmax.f32 %v671, %v673
      %825 = vmax.xlane.f32.xlu0 %v824
      %v826 = vpop.xlane.xlu0 %825
      %v827 = vmax.f32 %v677, %v679
      %828 = vmax.xlane.f32.xlu0 %v827
      %v829 = vpop.xlane.xlu0 %828
      %v830 = vmax.f32 %v681, %v683
      %831 = vmax.xlane.f32.xlu0 %v830
      %v832 = vpop.xlane.xlu0 %831
      %v833 = vmax.f32 %v687, %v689
      %834 = vmax.xlane.f32.xlu0 %v833
      %v835 = vpop.xlane.xlu0 %834
      %v836 = vmax.f32 %v691, %v693
      %837 = vmax.xlane.f32.xlu0 %v836
      %v838 = vpop.xlane.xlu0 %837
      %v839 = vmax.f32 %v697, %v699
      %840 = vmax.xlane.f32.xlu0 %v839
      %v841 = vpop.xlane.xlu0 %840
      %v842 = vmax.f32 %v701, %v703
      %843 = vmax.xlane.f32.xlu0 %v842
      %v844 = vpop.xlane.xlu0 %843
      %v845 = vmax.f32 %v707, %v709
      %846 = vmax.xlane.f32.xlu0 %v845
      %v847 = vpop.xlane.xlu0 %846
      %v848 = vmax.f32 %v711, %v713
      %849 = vmax.xlane.f32.xlu0 %v848
      %v850 = vpop.xlane.xlu0 %849
      %v851 = vmax.f32 %v717, %v719
      %852 = vmax.xlane.f32.xlu0 %v851
      %v853 = vpop.xlane.xlu0 %852
      %v854 = vmax.f32 %v721, %v723
      %855 = vmax.xlane.f32.xlu0 %v854
      %v856 = vpop.xlane.xlu0 %855
      %v857 = vmax.f32 %v727, %v729
      %858 = vmax.xlane.f32.xlu0 %v857
      %v859 = vpop.xlane.xlu0 %858
      %v860 = vmax.f32 %v731, %v733
      %861 = vmax.xlane.f32.xlu0 %v860
      %v862 = vpop.xlane.xlu0 %861
      %v863 = vmax.f32 %v737, %v739
      %864 = vmax.xlane.f32.xlu0 %v863
      %v865 = vpop.xlane.xlu0 %864
      %v866 = vmax.f32 %v741, %v743
      %867 = vmax.xlane.f32.xlu0 %v866
      %v868 = vpop.xlane.xlu0 %867
      %v869 = vmax.f32 %v747, %v749
      %870 = vmax.xlane.f32.xlu0 %v869
      %v871 = vpop.xlane.xlu0 %870
      %v872 = vmax.f32 %v751, %v753
      %873 = vmax.xlane.f32.xlu0 %v872
      %v874 = vpop.xlane.xlu0 %873
      %v875 = vmax.f32 %v757, %v759
      %876 = vmax.xlane.f32.xlu0 %v875
      %v877 = vpop.xlane.xlu0 %876
      %v878 = vmax.f32 %v761, %v763
      %879 = vmax.xlane.f32.xlu0 %v878
      %v880 = vpop.xlane.xlu0 %879
      %v881 = vmax.f32 %v767, %v769
      %882 = vmax.xlane.f32.xlu0 %v881
      %v883 = vpop.xlane.xlu0 %882
      %v884 = vmax.f32 %v771, %v773
      %885 = vmax.xlane.f32.xlu0 %v884
      %v886 = vpop.xlane.xlu0 %885
      %v887 = vmax.f32 %v777, %v779
      %888 = vmax.xlane.f32.xlu0 %v887
      %v889 = vpop.xlane.xlu0 %888
      %v890 = vmax.f32 %v781, %v783
      %891 = vmax.xlane.f32.xlu0 %v890
      %v892 = vpop.xlane.xlu0 %891
      %v893 = vmax.f32 %v787, %v789
      %894 = vmax.xlane.f32.xlu0 %v893
      %v895 = vpop.xlane.xlu0 %894
      %v896 = vmax.f32 %v791, %v793
      %897 = vmax.xlane.f32.xlu0 %v896
      %v898 = vpop.xlane.xlu0 %897
      %v899 = vmax.f32 %v797, %v799
      %900 = vmax.xlane.f32.xlu0 %v899
      %v901 = vpop.xlane.xlu0 %900
      %v902 = vmax.f32 %v801, %v803
      %903 = vmax.xlane.f32.xlu0 %v902
      %v904 = vpop.xlane.xlu0 %903
      %v905 = vmax.f32 %v807, %v809
      %906 = vmax.xlane.f32.xlu0 %v905
      %v907 = vpop.xlane.xlu0 %906
      %v908 = vmax.f32 %v811, %v813
      %909 = vmax.xlane.f32.xlu0 %v908
      %v910 = vpop.xlane.xlu0 %909
      %v911 = vsub.f32 %v657, %v817
      %v912 = vsub.f32 %v659, %v817
      %v913 = vsub.f32 %v661, %v820
      %v914 = vsub.f32 %v663, %v820
      %v915 = vsub.f32 %v667, %v823
      %v916 = vsub.f32 %v669, %v823
      %v917 = vsub.f32 %v671, %v826
      %v918 = vsub.f32 %v673, %v826
      %v919 = vsub.f32 %v677, %v829
      %v920 = vsub.f32 %v679, %v829
      %v921 = vsub.f32 %v681, %v832
      %v922 = vsub.f32 %v683, %v832
      %v923 = vsub.f32 %v687, %v835
      %v924 = vsub.f32 %v689, %v835
      %v925 = vsub.f32 %v691, %v838
      %v926 = vsub.f32 %v693, %v838
      %v927 = vsub.f32 %v697, %v841
      %v928 = vsub.f32 %v699, %v841
      %v929 = vsub.f32 %v701, %v844
      %v930 = vsub.f32 %v703, %v844
      %v931 = vsub.f32 %v707, %v847
      %v932 = vsub.f32 %v709, %v847
      %v933 = vsub.f32 %v711, %v850
      %v934 = vsub.f32 %v713, %v850
      %v935 = vsub.f32 %v717, %v853
      %v936 = vsub.f32 %v719, %v853
      %v937 = vsub.f32 %v721, %v856
      %v938 = vsub.f32 %v723, %v856
      %v939 = vsub.f32 %v727, %v859
      %v940 = vsub.f32 %v729, %v859
      %v941 = vsub.f32 %v731, %v862
      %v942 = vsub.f32 %v733, %v862
      %v943 = vsub.f32 %v737, %v865
      %v944 = vsub.f32 %v739, %v865
      %v945 = vsub.f32 %v741, %v868
      %v946 = vsub.f32 %v743, %v868
      %v947 = vsub.f32 %v747, %v871
      %v948 = vsub.f32 %v749, %v871
      %v949 = vsub.f32 %v751, %v874
      %v950 = vsub.f32 %v753, %v874
      %v951 = vsub.f32 %v757, %v877
      %v952 = vsub.f32 %v759, %v877
      %v953 = vsub.f32 %v761, %v880
      %v954 = vsub.f32 %v763, %v880
      %v955 = vsub.f32 %v767, %v883
      %v956 = vsub.f32 %v769, %v883
      %v957 = vsub.f32 %v771, %v886
      %v958 = vsub.f32 %v773, %v886
      %v959 = vsub.f32 %v777, %v889
      %v960 = vsub.f32 %v779, %v889
      %v961 = vsub.f32 %v781, %v892
      %v962 = vsub.f32 %v783, %v892
      %v963 = vsub.f32 %v787, %v895
      %v964 = vsub.f32 %v789, %v895
      %v965 = vsub.f32 %v791, %v898
      %v966 = vsub.f32 %v793, %v898
      %v967 = vsub.f32 %v797, %v901
      %v968 = vsub.f32 %v799, %v901
      %v969 = vsub.f32 %v801, %v904
      %v970 = vsub.f32 %v803, %v904
      %v971 = vsub.f32 %v807, %v907
      %v972 = vsub.f32 %v809, %v907
      %v973 = vsub.f32 %v811, %v910
      %v974 = vsub.f32 %v813, %v910
      %v975 = vmul.f32 %v911, 1.442695
      %v976 = vpow.pop %v975
      %v977 = vmul.f32 %v912, 1.442695
      %v978 = vpow.pop %v977
      %v979 = vmul.f32 %v913, 1.442695
      %v980 = vpow.pop %v979
      %v981 = vmul.f32 %v914, 1.442695
      %v982 = vpow.pop %v981
      %v983 = vmul.f32 %v915, 1.442695
      %v984 = vpow.pop %v983
      %v985 = vmul.f32 %v916, 1.442695
      %v986 = vpow.pop %v985
      %v987 = vmul.f32 %v917, 1.442695
      %v988 = vpow.pop %v987
      %v989 = vmul.f32 %v918, 1.442695
      %v990 = vpow.pop %v989
      %v991 = vmul.f32 %v919, 1.442695
      %v992 = vpow.pop %v991
      %v993 = vmul.f32 %v920, 1.442695
      %v994 = vpow.pop %v993
      %v995 = vmul.f32 %v921, 1.442695
      %v996 = vpow.pop %v995
      %v997 = vmul.f32 %v922, 1.442695
      %v998 = vpow.pop %v997
      %v999 = vmul.f32 %v923, 1.442695
      %v1000 = vpow.pop %v999
      %v1001 = vmul.f32 %v924, 1.442695
      %v1002 = vpow.pop %v1001
      %v1003 = vmul.f32 %v925, 1.442695
      %v1004 = vpow.pop %v1003
      %v1005 = vmul.f32 %v926, 1.442695
      %v1006 = vpow.pop %v1005
      %v1007 = vmul.f32 %v927, 1.442695
      %v1008 = vpow.pop %v1007
      %v1009 = vmul.f32 %v928, 1.442695
      %v1010 = vpow.pop %v1009
      %v1011 = vmul.f32 %v929, 1.442695
      %v1012 = vpow.pop %v1011
      %v1013 = vmul.f32 %v930, 1.442695
      %v1014 = vpow.pop %v1013
      %v1015 = vmul.f32 %v931, 1.442695
      %v1016 = vpow.pop %v1015
      %v1017 = vmul.f32 %v932, 1.442695
      %v1018 = vpow.pop %v1017
      %v1019 = vmul.f32 %v933, 1.442695
      %v1020 = vpow.pop %v1019
      %v1021 = vmul.f32 %v934, 1.442695
      %v1022 = vpow.pop %v1021
      %v1023 = vmul.f32 %v935, 1.442695
      %v1024 = vpow.pop %v1023
      %v1025 = vmul.f32 %v936, 1.442695
      %v1026 = vpow.pop %v1025
      %v1027 = vmul.f32 %v937, 1.442695
      %v1028 = vpow.pop %v1027
      %v1029 = vmul.f32 %v938, 1.442695
      %v1030 = vpow.pop %v1029
      %v1031 = vmul.f32 %v939, 1.442695
      %v1032 = vpow.pop %v1031
      %v1033 = vmul.f32 %v940, 1.442695
      %v1034 = vpow.pop %v1033
      %v1035 = vmul.f32 %v941, 1.442695
      %v1036 = vpow.pop %v1035
      %v1037 = vmul.f32 %v942, 1.442695
      %v1038 = vpow.pop %v1037
      %v1039 = vmul.f32 %v943, 1.442695
      %v1040 = vpow.pop %v1039
      %v1041 = vmul.f32 %v944, 1.442695
      %v1042 = vpow.pop %v1041
      %v1043 = vmul.f32 %v945, 1.442695
      %v1044 = vpow.pop %v1043
      %v1045 = vmul.f32 %v946, 1.442695
      %v1046 = vpow.pop %v1045
      %v1047 = vmul.f32 %v947, 1.442695
      %v1048 = vpow.pop %v1047
      %v1049 = vmul.f32 %v948, 1.442695
      %v1050 = vpow.pop %v1049
      %v1051 = vmul.f32 %v949, 1.442695
      %v1052 = vpow.pop %v1051
      %v1053 = vmul.f32 %v950, 1.442695
      %v1054 = vpow.pop %v1053
      %v1055 = vmul.f32 %v951, 1.442695
      %v1056 = vpow.pop %v1055
      %v1057 = vmul.f32 %v952, 1.442695
      %v1058 = vpow.pop %v1057
      %v1059 = vmul.f32 %v953, 1.442695
      %v1060 = vpow.pop %v1059
      %v1061 = vmul.f32 %v954, 1.442695
      %v1062 = vpow.pop %v1061
      %v1063 = vmul.f32 %v955, 1.442695
      %v1064 = vpow.pop %v1063
      %v1065 = vmul.f32 %v956, 1.442695
      %v1066 = vpow.pop %v1065
      %v1067 = vmul.f32 %v957, 1.442695
      %v1068 = vpow.pop %v1067
      %v1069 = vmul.f32 %v958, 1.442695
      %v1070 = vpow.pop %v1069
      %v1071 = vmul.f32 %v959, 1.442695
      %v1072 = vpow.pop %v1071
      %v1073 = vmul.f32 %v960, 1.442695
      %v1074 = vpow.pop %v1073
      %v1075 = vmul.f32 %v961, 1.442695
      %v1076 = vpow.pop %v1075
      %v1077 = vmul.f32 %v962, 1.442695
      %v1078 = vpow.pop %v1077
      %v1079 = vmul.f32 %v963, 1.442695
      %v1080 = vpow.pop %v1079
      %v1081 = vmul.f32 %v964, 1.442695
      %v1082 = vpow.pop %v1081
      %v1083 = vmul.f32 %v965, 1.442695
      %v1084 = vpow.pop %v1083
      %v1085 = vmul.f32 %v966, 1.442695
      %v1086 = vpow.pop %v1085
      %v1087 = vmul.f32 %v967, 1.442695
      %v1088 = vpow.pop %v1087
      %v1089 = vmul.f32 %v968, 1.442695
      %v1090 = vpow.pop %v1089
      %v1091 = vmul.f32 %v969, 1.442695
      %v1092 = vpow.pop %v1091
      %v1093 = vmul.f32 %v970, 1.442695
      %v1094 = vpow.pop %v1093
      %v1095 = vmul.f32 %v971, 1.442695
      %v1096 = vpow.pop %v1095
      %v1097 = vmul.f32 %v972, 1.442695
      %v1098 = vpow.pop %v1097
      %v1099 = vmul.f32 %v973, 1.442695
      %v1100 = vpow.pop %v1099
      %v1101 = vmul.f32 %v974, 1.442695
      %v1102 = vpow.pop %v1101
      %v1103 = vadd.f32 %v976, %v978
      %1104 = vadd.xlane.f32.xlu0 %v1103
      %v1105 = vpop.xlane.xlu0 %1104
      %v1106 = vadd.f32 %v980, %v982
      %1107 = vadd.xlane.f32.xlu0 %v1106
      %v1108 = vpop.xlane.xlu0 %1107
      %v1109 = vadd.f32 %v984, %v986
      %1110 = vadd.xlane.f32.xlu0 %v1109
      %v1111 = vpop.xlane.xlu0 %1110
      %v1112 = vadd.f32 %v988, %v990
      %1113 = vadd.xlane.f32.xlu0 %v1112
      %v1114 = vpop.xlane.xlu0 %1113
      %v1115 = vadd.f32 %v992, %v994
      %1116 = vadd.xlane.f32.xlu0 %v1115
      %v1117 = vpop.xlane.xlu0 %1116
      %v1118 = vadd.f32 %v996, %v998
      %1119 = vadd.xlane.f32.xlu0 %v1118
      %v1120 = vpop.xlane.xlu0 %1119
      %v1121 = vadd.f32 %v1000, %v1002
      %1122 = vadd.xlane.f32.xlu0 %v1121
      %v1123 = vpop.xlane.xlu0 %1122
      %v1124 = vadd.f32 %v1004, %v1006
      %1125 = vadd.xlane.f32.xlu0 %v1124
      %v1126 = vpop.xlane.xlu0 %1125
      %v1127 = vadd.f32 %v1008, %v1010
      %1128 = vadd.xlane.f32.xlu0 %v1127
      %v1129 = vpop.xlane.xlu0 %1128
      %v1130 = vadd.f32 %v1012, %v1014
      %1131 = vadd.xlane.f32.xlu0 %v1130
      %v1132 = vpop.xlane.xlu0 %1131
      %v1133 = vadd.f32 %v1016, %v1018
      %1134 = vadd.xlane.f32.xlu0 %v1133
      %v1135 = vpop.xlane.xlu0 %1134
      %v1136 = vadd.f32 %v1020, %v1022
      %1137 = vadd.xlane.f32.xlu0 %v1136
      %v1138 = vpop.xlane.xlu0 %1137
      %v1139 = vadd.f32 %v1024, %v1026
      %1140 = vadd.xlane.f32.xlu0 %v1139
      %v1141 = vpop.xlane.xlu0 %1140
      %v1142 = vadd.f32 %v1028, %v1030
      %1143 = vadd.xlane.f32.xlu0 %v1142
      %v1144 = vpop.xlane.xlu0 %1143
      %v1145 = vadd.f32 %v1032, %v1034
      %1146 = vadd.xlane.f32.xlu0 %v1145
      %v1147 = vpop.xlane.xlu0 %1146
      %v1148 = vadd.f32 %v1036, %v1038
      %1149 = vadd.xlane.f32.xlu0 %v1148
      %v1150 = vpop.xlane.xlu0 %1149
      %v1151 = vadd.f32 %v1040, %v1042
      %1152 = vadd.xlane.f32.xlu0 %v1151
      %v1153 = vpop.xlane.xlu0 %1152
      %v1154 = vadd.f32 %v1044, %v1046
      %1155 = vadd.xlane.f32.xlu0 %v1154
      %v1156 = vpop.xlane.xlu0 %1155
      %v1157 = vadd.f32 %v1048, %v1050
      %1158 = vadd.xlane.f32.xlu0 %v1157
      %v1159 = vpop.xlane.xlu0 %1158
      %v1160 = vadd.f32 %v1052, %v1054
      %1161 = vadd.xlane.f32.xlu0 %v1160
      %v1162 = vpop.xlane.xlu0 %1161
      %v1163 = vadd.f32 %v1056, %v1058
      %1164 = vadd.xlane.f32.xlu0 %v1163
      %v1165 = vpop.xlane.xlu0 %1164
      %v1166 = vadd.f32 %v1060, %v1062
      %1167 = vadd.xlane.f32.xlu0 %v1166
      %v1168 = vpop.xlane.xlu0 %1167
      %v1169 = vadd.f32 %v1064, %v1066
      %1170 = vadd.xlane.f32.xlu0 %v1169
      %v1171 = vpop.xlane.xlu0 %1170
      %v1172 = vadd.f32 %v1068, %v1070
      %1173 = vadd.xlane.f32.xlu0 %v1172
      %v1174 = vpop.xlane.xlu0 %1173
      %v1175 = vadd.f32 %v1072, %v1074
      %1176 = vadd.xlane.f32.xlu0 %v1175
      %v1177 = vpop.xlane.xlu0 %1176
      %v1178 = vadd.f32 %v1076, %v1078
      %1179 = vadd.xlane.f32.xlu0 %v1178
      %v1180 = vpop.xlane.xlu0 %1179
      %v1181 = vadd.f32 %v1080, %v1082
      %1182 = vadd.xlane.f32.xlu0 %v1181
      %v1183 = vpop.xlane.xlu0 %1182
      %v1184 = vadd.f32 %v1084, %v1086
      %1185 = vadd.xlane.f32.xlu0 %v1184
      %v1186 = vpop.xlane.xlu0 %1185
      %v1187 = vadd.f32 %v1088, %v1090
      %1188 = vadd.xlane.f32.xlu0 %v1187
      %v1189 = vpop.xlane.xlu0 %1188
      %v1190 = vadd.f32 %v1092, %v1094
      %1191 = vadd.xlane.f32.xlu0 %v1190
      %v1192 = vpop.xlane.xlu0 %1191
      %v1193 = vadd.f32 %v1096, %v1098
      %1194 = vadd.xlane.f32.xlu0 %v1193
      %v1195 = vpop.xlane.xlu0 %1194
      %v1196 = vadd.f32 %v1100, %v1102
      %1197 = vadd.xlane.f32.xlu0 %v1196
      %v1198 = vpop.xlane.xlu0 %1197
      %v1199 = vrcp.pop %v1105
      %v1200 = vrcp.pop %v1108
      %v1201 = vrcp.pop %v1111
      %v1202 = vrcp.pop %v1114
      %v1203 = vrcp.pop %v1117
      %v1204 = vrcp.pop %v1120
      %v1205 = vrcp.pop %v1123
      %v1206 = vrcp.pop %v1126
      %v1207 = vrcp.pop %v1129
      %v1208 = vrcp.pop %v1132
      %v1209 = vrcp.pop %v1135
      %v1210 = vrcp.pop %v1138
      %v1211 = vrcp.pop %v1141
      %v1212 = vrcp.pop %v1144
      %v1213 = vrcp.pop %v1147
      %v1214 = vrcp.pop %v1150
      %v1215 = vrcp.pop %v1153
      %v1216 = vrcp.pop %v1156
      %v1217 = vrcp.pop %v1159
      %v1218 = vrcp.pop %v1162
      %v1219 = vrcp.pop %v1165
      %v1220 = vrcp.pop %v1168
      %v1221 = vrcp.pop %v1171
      %v1222 = vrcp.pop %v1174
      %v1223 = vrcp.pop %v1177
      %v1224 = vrcp.pop %v1180
      %v1225 = vrcp.pop %v1183
      %v1226 = vrcp.pop %v1186
      %v1227 = vrcp.pop %v1189
      %v1228 = vrcp.pop %v1192
      %v1229 = vrcp.pop %v1195
      %v1230 = vrcp.pop %v1198
      %v1231 = vmul.f32 %v976, %v1199
      %v1232 = vmul.f32 %v978, %v1199
      %v1233 = vmul.f32 %v980, %v1200
      %v1234 = vmul.f32 %v982, %v1200
      %v1235 = vmul.f32 %v984, %v1201
      %v1236 = vmul.f32 %v986, %v1201
      %v1237 = vmul.f32 %v988, %v1202
      %v1238 = vmul.f32 %v990, %v1202
      %v1239 = vmul.f32 %v992, %v1203
      %v1240 = vmul.f32 %v994, %v1203
      %v1241 = vmul.f32 %v996, %v1204
      %v1242 = vmul.f32 %v998, %v1204
      %v1243 = vmul.f32 %v1000, %v1205
      %v1244 = vmul.f32 %v1002, %v1205
      %v1245 = vmul.f32 %v1004, %v1206
      %v1246 = vmul.f32 %v1006, %v1206
      %v1247 = vmul.f32 %v1008, %v1207
      %v1248 = vmul.f32 %v1010, %v1207
      %v1249 = vmul.f32 %v1012, %v1208
      %v1250 = vmul.f32 %v1014, %v1208
      %v1251 = vmul.f32 %v1016, %v1209
      %v1252 = vmul.f32 %v1018, %v1209
      %v1253 = vmul.f32 %v1020, %v1210
      %v1254 = vmul.f32 %v1022, %v1210
      %v1255 = vmul.f32 %v1024, %v1211
      %v1256 = vmul.f32 %v1026, %v1211
      %v1257 = vmul.f32 %v1028, %v1212
      %v1258 = vmul.f32 %v1030, %v1212
      %v1259 = vmul.f32 %v1032, %v1213
      %v1260 = vmul.f32 %v1034, %v1213
      %v1261 = vmul.f32 %v1036, %v1214
      %v1262 = vmul.f32 %v1038, %v1214
      %v1263 = vmul.f32 %v1040, %v1215
      %v1264 = vmul.f32 %v1042, %v1215
      %v1265 = vmul.f32 %v1044, %v1216
      %v1266 = vmul.f32 %v1046, %v1216
      %v1267 = vmul.f32 %v1048, %v1217
      %v1268 = vmul.f32 %v1050, %v1217
      %v1269 = vmul.f32 %v1052, %v1218
      %v1270 = vmul.f32 %v1054, %v1218
      %v1271 = vmul.f32 %v1056, %v1219
      %v1272 = vmul.f32 %v1058, %v1219
      %v1273 = vmul.f32 %v1060, %v1220
      %v1274 = vmul.f32 %v1062, %v1220
      %v1275 = vmul.f32 %v1064, %v1221
      %v1276 = vmul.f32 %v1066, %v1221
      %v1277 = vmul.f32 %v1068, %v1222
      %v1278 = vmul.f32 %v1070, %v1222
      %v1279 = vmul.f32 %v1072, %v1223
      %v1280 = vmul.f32 %v1074, %v1223
      %v1281 = vmul.f32 %v1076, %v1224
      %v1282 = vmul.f32 %v1078, %v1224
      %v1283 = vmul.f32 %v1080, %v1225
      %v1284 = vmul.f32 %v1082, %v1225
      %v1285 = vmul.f32 %v1084, %v1226
      %v1286 = vmul.f32 %v1086, %v1226
      %v1287 = vmul.f32 %v1088, %v1227
      %v1288 = vmul.f32 %v1090, %v1227
      %v1289 = vmul.f32 %v1092, %v1228
      %v1290 = vmul.f32 %v1094, %v1228
      %v1291 = vmul.f32 %v1096, %v1229
      %v1292 = vmul.f32 %v1098, %v1229
      %v1293 = vmul.f32 %v1100, %v1230
      %v1294 = vmul.f32 %v1102, %v1230
      %v1295 = vpack.c.bf16 %v1233, %v1231
      %v1296 = vpack.c.bf16 %v1234, %v1232
      %v1297 = vpack.c.bf16 %v1237, %v1235
      %v1298 = vpack.c.bf16 %v1238, %v1236
      %v1299 = vpack.c.bf16 %v1241, %v1239
      %v1300 = vpack.c.bf16 %v1242, %v1240
      %v1301 = vpack.c.bf16 %v1245, %v1243
      %v1302 = vpack.c.bf16 %v1246, %v1244
      %v1303 = vpack.c.bf16 %v1249, %v1247
      %v1304 = vpack.c.bf16 %v1250, %v1248
      %v1305 = vpack.c.bf16 %v1253, %v1251
      %v1306 = vpack.c.bf16 %v1254, %v1252
      %v1307 = vpack.c.bf16 %v1257, %v1255
      %v1308 = vpack.c.bf16 %v1258, %v1256
      %v1309 = vpack.c.bf16 %v1261, %v1259
      %v1310 = vpack.c.bf16 %v1262, %v1260
      %v1311 = vpack.c.bf16 %v1265, %v1263
      %v1312 = vpack.c.bf16 %v1266, %v1264
      %v1313 = vpack.c.bf16 %v1269, %v1267
      %v1314 = vpack.c.bf16 %v1270, %v1268
      %v1315 = vpack.c.bf16 %v1273, %v1271
      %v1316 = vpack.c.bf16 %v1274, %v1272
      %v1317 = vpack.c.bf16 %v1277, %v1275
      %v1318 = vpack.c.bf16 %v1278, %v1276
      %v1319 = vpack.c.bf16 %v1281, %v1279
      %v1320 = vpack.c.bf16 %v1282, %v1280
      %v1321 = vpack.c.bf16 %v1285, %v1283
      %v1322 = vpack.c.bf16 %v1286, %v1284
      %v1323 = vpack.c.bf16 %v1289, %v1287
      %v1324 = vpack.c.bf16 %v1290, %v1288
      %v1325 = vpack.c.bf16 %v1293, %v1291
      %v1326 = vpack.c.bf16 %v1294, %v1292
      %1327 = vmatprep.subr.bf16.mxu0 %v1296
      %1328 = vmatpush1.bf16.xpose.msra.mxu0 %v1295
      %1329 = vmatprep.subr.bf16.mxu0 %v1298
      %1330 = vmatpush1.bf16.xpose.msra.mxu0 %v1297
      %1331 = vmatprep.subr.bf16.mxu0 %v1300
      %1332 = vmatpush1.bf16.xpose.msra.mxu0 %v1299
      %1333 = vmatprep.subr.bf16.mxu0 %v1302
      %1334 = vmatpush1.bf16.xpose.msra.mxu0 %v1301
      %1335 = vmatprep.subr.bf16.mxu0 %v1304
      %1336 = vmatpush1.bf16.xpose.msra.mxu0 %v1303
      %1337 = vmatprep.subr.bf16.mxu0 %v1306
      %1338 = vmatpush1.bf16.xpose.msra.mxu0 %v1305
      %1339 = vmatprep.subr.bf16.mxu0 %v1308
      %1340 = vmatpush1.bf16.xpose.msra.mxu0 %v1307
      %1341 = vmatprep.subr.bf16.mxu0 %v1310
      %1342 = vmatpush1.bf16.xpose.msra.mxu0 %v1309
      %1343 = vmatprep.subr.bf16.mxu0 %v1312
      %1344 = vmatpush1.bf16.xpose.msra.mxu0 %v1311
      %1345 = vmatprep.subr.bf16.mxu0 %v1314
      %1346 = vmatpush1.bf16.xpose.msra.mxu0 %v1313
      %1347 = vmatprep.subr.bf16.mxu0 %v1316
      %1348 = vmatpush1.bf16.xpose.msra.mxu0 %v1315
      %1349 = vmatprep.subr.bf16.mxu0 %v1318
      %1350 = vmatpush1.bf16.xpose.msra.mxu0 %v1317
      %1351 = vmatprep.subr.bf16.mxu0 %v1320
      %1352 = vmatpush1.bf16.xpose.msra.mxu0 %v1319
      %1353 = vmatprep.subr.bf16.mxu0 %v1322
      %1354 = vmatpush1.bf16.xpose.msra.mxu0 %v1321
      %1355 = vmatprep.subr.bf16.mxu0 %v1324
      %1356 = vmatpush1.bf16.xpose.msra.mxu0 %v1323
      %1357 = vmatprep.subr.bf16.mxu0 %v1326
      %1358 = vmatpush1.bf16.xpose.msra.mxu0 %v1325
      %1359 = vmatprep.mubr.bf16.mxu0 %v540
      %1360 = vmatmul.mubr.bf16.gmra.mrb[0].mxu0 %v539
      %v1361 = vpop.f32.mrb[0].mxu0
      %v1362 = vadd.f32 0.0, %v1361
      %v1363 = vpop.f32.mrb[0].mxu0
      %v1364 = vadd.f32 0.0, %v1363
      %v1365 = vpop.f32.mrb[0].mxu0
      %v1366 = vadd.f32 0.0, %v1365
      %v1367 = vpop.f32.mrb[0].mxu0
      %v1368 = vadd.f32 0.0, %v1367
      %1369 = vdwg.mxu0
      %v1370 = vpack.c.bf16 %v388, %v386
      %v1371 = vpack.c.bf16 %v389, %v387
      %v1372 = vpack.c.bf16 %v511, %v507
      %v1373 = vpack.c.bf16 %v513, %v509
      %v1374 = vpack.c.bf16 %v531, %v527
      %v1375 = vpack.c.bf16 %v533, %v529
      %1376 = vxpose.xlu0.c.b16.start [1/8] %v1370, 128
      %1377 = vxpose.xlu0.c.b16.cont [2/8] 0, 128
      %1378 = vxpose.xlu0.c.b16.cont [3/8] 0, 128
      %1379 = vxpose.xlu0.c.b16.cont [4/8] 0, 128
      %1380 = vxpose.xlu0.c.b16.cont [5/8] 0, 128
      %1381 = vxpose.xlu0.c.b16.cont [6/8] 0, 128
      %1382 = vxpose.xlu0.c.b16.cont [7/8] 0, 128
      %1383 = vxpose.xlu0.c.b16.end [8/8] 0, 128
      %v1384 = vpop.trf.xlu0
      %v1385 = vpop.trf.xlu0
      %v1386 = vpop.trf.xlu0
      %v1387 = vpop.trf.xlu0
      %v1388 = vpop.trf.xlu0
      %v1389 = vpop.trf.xlu0
      %v1390 = vpop.trf.xlu0
      %v1391 = vpop.trf.xlu0
      %1392 = vxpose.xlu0.c.b16.start [1/8] %v1371, 128
      %1393 = vxpose.xlu0.c.b16.cont [2/8] 0, 128
      %1394 = vxpose.xlu0.c.b16.cont [3/8] 0, 128
      %1395 = vxpose.xlu0.c.b16.cont [4/8] 0, 128
      %1396 = vxpose.xlu0.c.b16.cont [5/8] 0, 128
      %1397 = vxpose.xlu0.c.b16.cont [6/8] 0, 128
      %1398 = vxpose.xlu0.c.b16.cont [7/8] 0, 128
      %1399 = vxpose.xlu0.c.b16.end [8/8] 0, 128
      %v1400 = vpop.trf.xlu0
      %v1401 = vpop.trf.xlu0
      %v1402 = vpop.trf.xlu0
      %v1403 = vpop.trf.xlu0
      %v1404 = vpop.trf.xlu0
      %v1405 = vpop.trf.xlu0
      %v1406 = vpop.trf.xlu0
      %v1407 = vpop.trf.xlu0
      %v1409 = vsel %vm573, %v1384, 0
      %v1412 = vsel %vm573, %v1385, 0
      %v1415 = vsel %vm573, %v1386, 0
      %v1418 = vsel %vm573, %v1387, 0
      %v1421 = vsel %vm573, %v1388, 0
      %v1424 = vsel %vm573, %v1389, 0
      %v1427 = vsel %vm573, %v1390, 0
      %v1430 = vsel %vm573, %v1391, 0
      %v1433 = vsel %vm573, %v1400, 0
      %v1436 = vsel %vm573, %v1401, 0
      %v1439 = vsel %vm573, %v1402, 0
      %v1442 = vsel %vm573, %v1403, 0
      %v1445 = vsel %vm573, %v1404, 0
      %v1448 = vsel %vm573, %v1405, 0
      %v1451 = vsel %vm573, %v1406, 0
      %v1454 = vsel %vm573, %v1407, 0
      %1456 = vmatprep.subr.bf16.mxu0 %v1373
      %1457 = vmatpush1.bf16.msra.mxu0 %v1372
      %1458 = vmatprep.subr.bf16.mxu0 0
      %1459 = vmatpush1.bf16.msra.mxu0 0
      %1460 = vmatprep.subr.bf16.mxu0 0
      %1461 = vmatpush1.bf16.msra.mxu0 0
      %1462 = vmatprep.subr.bf16.mxu0 0
      %1463 = vmatpush1.bf16.msra.mxu0 0
      %1464 = vmatprep.subr.bf16.mxu0 0
      %1465 = vmatpush1.bf16.msra.mxu0 0
      %1466 = vmatprep.subr.bf16.mxu0 0
      %1467 = vmatpush1.bf16.msra.mxu0 0
      %1468 = vmatprep.subr.bf16.mxu0 0
      %1469 = vmatpush1.bf16.msra.mxu0 0
      %1470 = vmatprep.subr.bf16.mxu0 0
      %1471 = vmatpush1.bf16.msra.mxu0 0
      %1472 = vmatprep.subr.bf16.mxu0 0
      %1473 = vmatpush1.bf16.msra.mxu0 0
      %1474 = vmatprep.subr.bf16.mxu0 0
      %1475 = vmatpush1.bf16.msra.mxu0 0
      %1476 = vmatprep.subr.bf16.mxu0 0
      %1477 = vmatpush1.bf16.msra.mxu0 0
      %1478 = vmatprep.subr.bf16.mxu0 0
      %1479 = vmatpush1.bf16.msra.mxu0 0
      %1480 = vmatprep.subr.bf16.mxu0 0
      %1481 = vmatpush1.bf16.msra.mxu0 0
      %1482 = vmatprep.subr.bf16.mxu0 0
      %1483 = vmatpush1.bf16.msra.mxu0 0
      %1484 = vmatprep.subr.bf16.mxu0 0
      %1485 = vmatpush1.bf16.msra.mxu0 0
      %1486 = vmatprep.subr.bf16.mxu0 0
      %1487 = vmatpush1.bf16.msra.mxu0 0
      %1488 = vmatprep.mubr.bf16.mxu0 0
      %1489 = vmatmul.mubr.bf16.gmra.mrb[0].mxu0 %v1409
      %v1490 = vpop.f32.mrb[0].mxu0
      %v1491 = vadd.f32 0.0, %v1490
      %v1492 = vpop.f32.mrb[0].mxu0
      %v1493 = vadd.f32 0.0, %v1492
      %v1494 = vpop.f32.mrb[0].mxu0
      %v1495 = vadd.f32 0.0, %v1494
      %v1496 = vpop.f32.mrb[0].mxu0
      %v1497 = vadd.f32 0.0, %v1496
      %1498 = vmatprep.mubr.bf16.mxu0 0
      %1499 = vmatmul.mubr.bf16.gmra.mrb[0].mxu0 %v1412
      %v1500 = vpop.f32.mrb[0].mxu0
      %v1501 = vadd.f32 0.0, %v1500
      %v1502 = vpop.f32.mrb[0].mxu0
      %v1503 = vadd.f32 0.0, %v1502
      %v1504 = vpop.f32.mrb[0].mxu0
      %v1505 = vadd.f32 0.0, %v1504
      %v1506 = vpop.f32.mrb[0].mxu0
      %v1507 = vadd.f32 0.0, %v1506
      %1508 = vmatprep.mubr.bf16.mxu0 0
      %1509 = vmatmul.mubr.bf16.gmra.mrb[0].mxu0 %v1415
      %v1510 = vpop.f32.mrb[0].mxu0
      %v1511 = vadd.f32 0.0, %v1510
      %v1512 = vpop.f32.mrb[0].mxu0
      %v1513 = vadd.f32 0.0, %v1512
      %v1514 = vpop.f32.mrb[0].mxu0
      %v1515 = vadd.f32 0.0, %v1514
      %v1516 = vpop.f32.mrb[0].mxu0
      %v1517 = vadd.f32 0.0, %v1516
      %1518 = vmatprep.mubr.bf16.mxu0 0
      %1519 = vmatmul.mubr.bf16.gmra.mrb[0].mxu0 %v1418
      %v1520 = vpop.f32.mrb[0].mxu0
      %v1521 = vadd.f32 0.0, %v1520
      %v1522 = vpop.f32.mrb[0].mxu0
      %v1523 = vadd.f32 0.0, %v1522
      %v1524 = vpop.f32.mrb[0].mxu0
      %v1525 = vadd.f32 0.0, %v1524
      %v1526 = vpop.f32.mrb[0].mxu0
      %v1527 = vadd.f32 0.0, %v1526
      %1528 = vmatprep.mubr.bf16.mxu0 0
      %1529 = vmatmul.mubr.bf16.gmra.mrb[0].mxu0 %v1421
      %v1530 = vpop.f32.mrb[0].mxu0
      %v1531 = vadd.f32 0.0, %v1530
      %v1532 = vpop.f32.mrb[0].mxu0
      %v1533 = vadd.f32 0.0, %v1532
      %v1534 = vpop.f32.mrb[0].mxu0
      %v1535 = vadd.f32 0.0, %v1534
      %v1536 = vpop.f32.mrb[0].mxu0
      %v1537 = vadd.f32 0.0, %v1536
      %1538 = vmatprep.mubr.bf16.mxu0 0
      %1539 = vmatmul.mubr.bf16.gmra.mrb[0].mxu0 %v1424
      %v1540 = vpop.f32.mrb[0].mxu0
      %v1541 = vadd.f32 0.0, %v1540
      %v1542 = vpop.f32.mrb[0].mxu0
      %v1543 = vadd.f32 0.0, %v1542
      %v1544 = vpop.f32.mrb[0].mxu0
      %v1545 = vadd.f32 0.0, %v1544
      %v1546 = vpop.f32.mrb[0].mxu0
      %v1547 = vadd.f32 0.0, %v1546
      %1548 = vmatprep.mubr.bf16.mxu0 0
      %1549 = vmatmul.mubr.bf16.gmra.mrb[0].mxu0 %v1427
      %v1550 = vpop.f32.mrb[0].mxu0
      %v1551 = vadd.f32 0.0, %v1550
      %v1552 = vpop.f32.mrb[0].mxu0
      %v1553 = vadd.f32 0.0, %v1552
      %v1554 = vpop.f32.mrb[0].mxu0
      %v1555 = vadd.f32 0.0, %v1554
      %v1556 = vpop.f32.mrb[0].mxu0
      %v1557 = vadd.f32 0.0, %v1556
      %1558 = vmatprep.mubr.bf16.mxu0 0
      %1559 = vmatmul.mubr.bf16.gmra.mrb[0].mxu0 %v1430
      %v1560 = vpop.f32.mrb[0].mxu0
      %v1561 = vadd.f32 0.0, %v1560
      %v1562 = vpop.f32.mrb[0].mxu0
      %v1563 = vadd.f32 0.0, %v1562
      %v1564 = vpop.f32.mrb[0].mxu0
      %v1565 = vadd.f32 0.0, %v1564
      %v1566 = vpop.f32.mrb[0].mxu0
      %v1567 = vadd.f32 0.0, %v1566
      %1568 = vmatprep.mubr.bf16.mxu0 0
      %1569 = vmatmul.mubr.bf16.gmra.mrb[0].mxu0 %v1433
      %v1570 = vpop.f32.mrb[0].mxu0
      %v1571 = vadd.f32 0.0, %v1570
      %v1572 = vpop.f32.mrb[0].mxu0
      %v1573 = vadd.f32 0.0, %v1572
      %v1574 = vpop.f32.mrb[0].mxu0
      %v1575 = vadd.f32 0.0, %v1574
      %v1576 = vpop.f32.mrb[0].mxu0
      %v1577 = vadd.f32 0.0, %v1576
      %1578 = vmatprep.mubr.bf16.mxu0 0
      %1579 = vmatmul.mubr.bf16.gmra.mrb[0].mxu0 %v1436
      %v1580 = vpop.f32.mrb[0].mxu0
      %v1581 = vadd.f32 0.0, %v1580
      %v1582 = vpop.f32.mrb[0].mxu0
      %v1583 = vadd.f32 0.0, %v1582
      %v1584 = vpop.f32.mrb[0].mxu0
      %v1585 = vadd.f32 0.0, %v1584
      %v1586 = vpop.f32.mrb[0].mxu0
      %v1587 = vadd.f32 0.0, %v1586
      %1588 = vmatprep.mubr.bf16.mxu0 0
      %1589 = vmatmul.mubr.bf16.gmra.mrb[0].mxu0 %v1439
      %v1590 = vpop.f32.mrb[0].mxu0
      %v1591 = vadd.f32 0.0, %v1590
      %v1592 = vpop.f32.mrb[0].mxu0
      %v1593 = vadd.f32 0.0, %v1592
      %v1594 = vpop.f32.mrb[0].mxu0
      %v1595 = vadd.f32 0.0, %v1594
      %v1596 = vpop.f32.mrb[0].mxu0
      %v1597 = vadd.f32 0.0, %v1596
      %1598 = vmatprep.mubr.bf16.mxu0 0
      %1599 = vmatmul.mubr.bf16.gmra.mrb[0].mxu0 %v1442
      %v1600 = vpop.f32.mrb[0].mxu0
      %v1601 = vadd.f32 0.0, %v1600
      %v1602 = vpop.f32.mrb[0].mxu0
      %v1603 = vadd.f32 0.0, %v1602
      %v1604 = vpop.f32.mrb[0].mxu0
      %v1605 = vadd.f32 0.0, %v1604
      %v1606 = vpop.f32.mrb[0].mxu0
      %v1607 = vadd.f32 0.0, %v1606
      %1608 = vmatprep.mubr.bf16.mxu0 0
      %1609 = vmatmul.mubr.bf16.gmra.mrb[0].mxu0 %v1445
      %v1610 = vpop.f32.mrb[0].mxu0
      %v1611 = vadd.f32 0.0, %v1610
      %v1612 = vpop.f32.mrb[0].mxu0
      %v1613 = vadd.f32 0.0, %v1612
      %v1614 = vpop.f32.mrb[0].mxu0
      %v1615 = vadd.f32 0.0, %v1614
      %v1616 = vpop.f32.mrb[0].mxu0
      %v1617 = vadd.f32 0.0, %v1616
      %1618 = vmatprep.mubr.bf16.mxu0 0
      %1619 = vmatmul.mubr.bf16.gmra.mrb[0].mxu0 %v1448
      %v1620 = vpop.f32.mrb[0].mxu0
      %v1621 = vadd.f32 0.0, %v1620
      %v1622 = vpop.f32.mrb[0].mxu0
      %v1623 = vadd.f32 0.0, %v1622
      %v1624 = vpop.f32.mrb[0].mxu0
      %v1625 = vadd.f32 0.0, %v1624
      %v1626 = vpop.f32.mrb[0].mxu0
      %v1627 = vadd.f32 0.0, %v1626
      %1628 = vmatprep.mubr.bf16.mxu0 0
      %1629 = vmatmul.mubr.bf16.gmra.mrb[0].mxu0 %v1451
      %v1630 = vpop.f32.mrb[0].mxu0
      %v1631 = vadd.f32 0.0, %v1630
      %v1632 = vpop.f32.mrb[0].mxu0
      %v1633 = vadd.f32 0.0, %v1632
      %v1634 = vpop.f32.mrb[0].mxu0
      %v1635 = vadd.f32 0.0, %v1634
      %v1636 = vpop.f32.mrb[0].mxu0
      %v1637 = vadd.f32 0.0, %v1636
      %1638 = vmatprep.mubr.bf16.mxu0 0
      %1639 = vmatmul.mubr.bf16.gmra.mrb[0].mxu0 %v1454
      %v1640 = vpop.f32.mrb[0].mxu0
      %v1641 = vadd.f32 0.0, %v1640
      %v1642 = vpop.f32.mrb[0].mxu0
      %v1643 = vadd.f32 0.0, %v1642
      %v1644 = vpop.f32.mrb[0].mxu0
      %v1645 = vadd.f32 0.0, %v1644
      %v1646 = vpop.f32.mrb[0].mxu0
      %v1647 = vadd.f32 0.0, %v1646
      %1648 = vdwg.mxu0
      %v1649 = vmax.f32 %v1491, %v1493
      %1650 = vmax.xlane.f32.xlu0 %v1649
      %v1651 = vpop.xlane.xlu0 %1650
      %v1652 = vmax.f32 %v1495, %v1497
      %1653 = vmax.xlane.f32.xlu0 %v1652
      %v1654 = vpop.xlane.xlu0 %1653
      %v1655 = vmax.f32 %v1501, %v1503
      %1656 = vmax.xlane.f32.xlu0 %v1655
      %v1657 = vpop.xlane.xlu0 %1656
      %v1658 = vmax.f32 %v1505, %v1507
      %1659 = vmax.xlane.f32.xlu0 %v1658
      %v1660 = vpop.xlane.xlu0 %1659
      %v1661 = vmax.f32 %v1511, %v1513
      %1662 = vmax.xlane.f32.xlu0 %v1661
      %v1663 = vpop.xlane.xlu0 %1662
      %v1664 = vmax.f32 %v1515, %v1517
      %1665 = vmax.xlane.f32.xlu0 %v1664
      %v1666 = vpop.xlane.xlu0 %1665
      %v1667 = vmax.f32 %v1521, %v1523
      %1668 = vmax.xlane.f32.xlu0 %v1667
      %v1669 = vpop.xlane.xlu0 %1668
      %v1670 = vmax.f32 %v1525, %v1527
      %1671 = vmax.xlane.f32.xlu0 %v1670
      %v1672 = vpop.xlane.xlu0 %1671
      %v1673 = vmax.f32 %v1531, %v1533
      %1674 = vmax.xlane.f32.xlu0 %v1673
      %v1675 = vpop.xlane.xlu0 %1674
      %v1676 = vmax.f32 %v1535, %v1537
      %1677 = vmax.xlane.f32.xlu0 %v1676
      %v1678 = vpop.xlane.xlu0 %1677
      %v1679 = vmax.f32 %v1541, %v1543
      %1680 = vmax.xlane.f32.xlu0 %v1679
      %v1681 = vpop.xlane.xlu0 %1680
      %v1682 = vmax.f32 %v1545, %v1547
      %1683 = vmax.xlane.f32.xlu0 %v1682
      %v1684 = vpop.xlane.xlu0 %1683
      %v1685 = vmax.f32 %v1551, %v1553
      %1686 = vmax.xlane.f32.xlu0 %v1685
      %v1687 = vpop.xlane.xlu0 %1686
      %v1688 = vmax.f32 %v1555, %v1557
      %1689 = vmax.xlane.f32.xlu0 %v1688
      %v1690 = vpop.xlane.xlu0 %1689
      %v1691 = vmax.f32 %v1561, %v1563
      %1692 = vmax.xlane.f32.xlu0 %v1691
      %v1693 = vpop.xlane.xlu0 %1692
      %v1694 = vmax.f32 %v1565, %v1567
      %1695 = vmax.xlane.f32.xlu0 %v1694
      %v1696 = vpop.xlane.xlu0 %1695
      %v1697 = vmax.f32 %v1571, %v1573
      %1698 = vmax.xlane.f32.xlu0 %v1697
      %v1699 = vpop.xlane.xlu0 %1698
      %v1700 = vmax.f32 %v1575, %v1577
      %1701 = vmax.xlane.f32.xlu0 %v1700
      %v1702 = vpop.xlane.xlu0 %1701
      %v1703 = vmax.f32 %v1581, %v1583
      %1704 = vmax.xlane.f32.xlu0 %v1703
      %v1705 = vpop.xlane.xlu0 %1704
      %v1706 = vmax.f32 %v1585, %v1587
      %1707 = vmax.xlane.f32.xlu0 %v1706
      %v1708 = vpop.xlane.xlu0 %1707
      %v1709 = vmax.f32 %v1591, %v1593
      %1710 = vmax.xlane.f32.xlu0 %v1709
      %v1711 = vpop.xlane.xlu0 %1710
      %v1712 = vmax.f32 %v1595, %v1597
      %1713 = vmax.xlane.f32.xlu0 %v1712
      %v1714 = vpop.xlane.xlu0 %1713
      %v1715 = vmax.f32 %v1601, %v1603
      %1716 = vmax.xlane.f32.xlu0 %v1715
      %v1717 = vpop.xlane.xlu0 %1716
      %v1718 = vmax.f32 %v1605, %v1607
      %1719 = vmax.xlane.f32.xlu0 %v1718
      %v1720 = vpop.xlane.xlu0 %1719
      %v1721 = vmax.f32 %v1611, %v1613
      %1722 = vmax.xlane.f32.xlu0 %v1721
      %v1723 = vpop.xlane.xlu0 %1722
      %v1724 = vmax.f32 %v1615, %v1617
      %1725 = vmax.xlane.f32.xlu0 %v1724
      %v1726 = vpop.xlane.xlu0 %1725
      %v1727 = vmax.f32 %v1621, %v1623
      %1728 = vmax.xlane.f32.xlu0 %v1727
      %v1729 = vpop.xlane.xlu0 %1728
      %v1730 = vmax.f32 %v1625, %v1627
      %1731 = vmax.xlane.f32.xlu0 %v1730
      %v1732 = vpop.xlane.xlu0 %1731
      %v1733 = vmax.f32 %v1631, %v1633
      %1734 = vmax.xlane.f32.xlu0 %v1733
      %v1735 = vpop.xlane.xlu0 %1734
      %v1736 = vmax.f32 %v1635, %v1637
      %1737 = vmax.xlane.f32.xlu0 %v1736
      %v1738 = vpop.xlane.xlu0 %1737
      %v1739 = vmax.f32 %v1641, %v1643
      %1740 = vmax.xlane.f32.xlu0 %v1739
      %v1741 = vpop.xlane.xlu0 %1740
      %v1742 = vmax.f32 %v1645, %v1647
      %1743 = vmax.xlane.f32.xlu0 %v1742
      %v1744 = vpop.xlane.xlu0 %1743
      %v1745 = vsub.f32 %v1491, %v1651
      %v1746 = vsub.f32 %v1493, %v1651
      %v1747 = vsub.f32 %v1495, %v1654
      %v1748 = vsub.f32 %v1497, %v1654
      %v1749 = vsub.f32 %v1501, %v1657
      %v1750 = vsub.f32 %v1503, %v1657
      %v1751 = vsub.f32 %v1505, %v1660
      %v1752 = vsub.f32 %v1507, %v1660
      %v1753 = vsub.f32 %v1511, %v1663
      %v1754 = vsub.f32 %v1513, %v1663
      %v1755 = vsub.f32 %v1515, %v1666
      %v1756 = vsub.f32 %v1517, %v1666
      %v1757 = vsub.f32 %v1521, %v1669
      %v1758 = vsub.f32 %v1523, %v1669
      %v1759 = vsub.f32 %v1525, %v1672
      %v1760 = vsub.f32 %v1527, %v1672
      %v1761 = vsub.f32 %v1531, %v1675
      %v1762 = vsub.f32 %v1533, %v1675
      %v1763 = vsub.f32 %v1535, %v1678
      %v1764 = vsub.f32 %v1537, %v1678
      %v1765 = vsub.f32 %v1541, %v1681
      %v1766 = vsub.f32 %v1543, %v1681
      %v1767 = vsub.f32 %v1545, %v1684
      %v1768 = vsub.f32 %v1547, %v1684
      %v1769 = vsub.f32 %v1551, %v1687
      %v1770 = vsub.f32 %v1553, %v1687
      %v1771 = vsub.f32 %v1555, %v1690
      %v1772 = vsub.f32 %v1557, %v1690
      %v1773 = vsub.f32 %v1561, %v1693
      %v1774 = vsub.f32 %v1563, %v1693
      %v1775 = vsub.f32 %v1565, %v1696
      %v1776 = vsub.f32 %v1567, %v1696
      %v1777 = vsub.f32 %v1571, %v1699
      %v1778 = vsub.f32 %v1573, %v1699
      %v1779 = vsub.f32 %v1575, %v1702
      %v1780 = vsub.f32 %v1577, %v1702
      %v1781 = vsub.f32 %v1581, %v1705
      %v1782 = vsub.f32 %v1583, %v1705
      %v1783 = vsub.f32 %v1585, %v1708
      %v1784 = vsub.f32 %v1587, %v1708
      %v1785 = vsub.f32 %v1591, %v1711
      %v1786 = vsub.f32 %v1593, %v1711
      %v1787 = vsub.f32 %v1595, %v1714
      %v1788 = vsub.f32 %v1597, %v1714
      %v1789 = vsub.f32 %v1601, %v1717
      %v1790 = vsub.f32 %v1603, %v1717
      %v1791 = vsub.f32 %v1605, %v1720
      %v1792 = vsub.f32 %v1607, %v1720
      %v1793 = vsub.f32 %v1611, %v1723
      %v1794 = vsub.f32 %v1613, %v1723
      %v1795 = vsub.f32 %v1615, %v1726
      %v1796 = vsub.f32 %v1617, %v1726
      %v1797 = vsub.f32 %v1621, %v1729
      %v1798 = vsub.f32 %v1623, %v1729
      %v1799 = vsub.f32 %v1625, %v1732
      %v1800 = vsub.f32 %v1627, %v1732
      %v1801 = vsub.f32 %v1631, %v1735
      %v1802 = vsub.f32 %v1633, %v1735
      %v1803 = vsub.f32 %v1635, %v1738
      %v1804 = vsub.f32 %v1637, %v1738
      %v1805 = vsub.f32 %v1641, %v1741
      %v1806 = vsub.f32 %v1643, %v1741
      %v1807 = vsub.f32 %v1645, %v1744
      %v1808 = vsub.f32 %v1647, %v1744
      %v1809 = vmul.f32 %v1745, 1.442695
      %v1810 = vpow.pop %v1809
      %v1811 = vmul.f32 %v1746, 1.442695
      %v1812 = vpow.pop %v1811
      %v1813 = vmul.f32 %v1747, 1.442695
      %v1814 = vpow.pop %v1813
      %v1815 = vmul.f32 %v1748, 1.442695
      %v1816 = vpow.pop %v1815
      %v1817 = vmul.f32 %v1749, 1.442695
      %v1818 = vpow.pop %v1817
      %v1819 = vmul.f32 %v1750, 1.442695
      %v1820 = vpow.pop %v1819
      %v1821 = vmul.f32 %v1751, 1.442695
      %v1822 = vpow.pop %v1821
      %v1823 = vmul.f32 %v1752, 1.442695
      %v1824 = vpow.pop %v1823
      %v1825 = vmul.f32 %v1753, 1.442695
      %v1826 = vpow.pop %v1825
      %v1827 = vmul.f32 %v1754, 1.442695
      %v1828 = vpow.pop %v1827
      %v1829 = vmul.f32 %v1755, 1.442695
      %v1830 = vpow.pop %v1829
      %v1831 = vmul.f32 %v1756, 1.442695
      %v1832 = vpow.pop %v1831
      %v1833 = vmul.f32 %v1757, 1.442695
      %v1834 = vpow.pop %v1833
      %v1835 = vmul.f32 %v1758, 1.442695
      %v1836 = vpow.pop %v1835
      %v1837 = vmul.f32 %v1759, 1.442695
      %v1838 = vpow.pop %v1837
      %v1839 = vmul.f32 %v1760, 1.442695
      %v1840 = vpow.pop %v1839
      %v1841 = vmul.f32 %v1761, 1.442695
      %v1842 = vpow.pop %v1841
      %v1843 = vmul.f32 %v1762, 1.442695
      %v1844 = vpow.pop %v1843
      %v1845 = vmul.f32 %v1763, 1.442695
      %v1846 = vpow.pop %v1845
      %v1847 = vmul.f32 %v1764, 1.442695
      %v1848 = vpow.pop %v1847
      %v1849 = vmul.f32 %v1765, 1.442695
      %v1850 = vpow.pop %v1849
      %v1851 = vmul.f32 %v1766, 1.442695
      %v1852 = vpow.pop %v1851
      %v1853 = vmul.f32 %v1767, 1.442695
      %v1854 = vpow.pop %v1853
      %v1855 = vmul.f32 %v1768, 1.442695
      %v1856 = vpow.pop %v1855
      %v1857 = vmul.f32 %v1769, 1.442695
      %v1858 = vpow.pop %v1857
      %v1859 = vmul.f32 %v1770, 1.442695
      %v1860 = vpow.pop %v1859
      %v1861 = vmul.f32 %v1771, 1.442695
      %v1862 = vpow.pop %v1861
      %v1863 = vmul.f32 %v1772, 1.442695
      %v1864 = vpow.pop %v1863
      %v1865 = vmul.f32 %v1773, 1.442695
      %v1866 = vpow.pop %v1865
      %v1867 = vmul.f32 %v1774, 1.442695
      %v1868 = vpow.pop %v1867
      %v1869 = vmul.f32 %v1775, 1.442695
      %v1870 = vpow.pop %v1869
      %v1871 = vmul.f32 %v1776, 1.442695
      %v1872 = vpow.pop %v1871
      %v1873 = vmul.f32 %v1777, 1.442695
      %v1874 = vpow.pop %v1873
      %v1875 = vmul.f32 %v1778, 1.442695
      %v1876 = vpow.pop %v1875
      %v1877 = vmul.f32 %v1779, 1.442695
      %v1878 = vpow.pop %v1877
      %v1879 = vmul.f32 %v1780, 1.442695
      %v1880 = vpow.pop %v1879
      %v1881 = vmul.f32 %v1781, 1.442695
      %v1882 = vpow.pop %v1881
      %v1883 = vmul.f32 %v1782, 1.442695
      %v1884 = vpow.pop %v1883
      %v1885 = vmul.f32 %v1783, 1.442695
      %v1886 = vpow.pop %v1885
      %v1887 = vmul.f32 %v1784, 1.442695
      %v1888 = vpow.pop %v1887
      %v1889 = vmul.f32 %v1785, 1.442695
      %v1890 = vpow.pop %v1889
      %v1891 = vmul.f32 %v1786, 1.442695
      %v1892 = vpow.pop %v1891
      %v1893 = vmul.f32 %v1787, 1.442695
      %v1894 = vpow.pop %v1893
      %v1895 = vmul.f32 %v1788, 1.442695
      %v1896 = vpow.pop %v1895
      %v1897 = vmul.f32 %v1789, 1.442695
      %v1898 = vpow.pop %v1897
      %v1899 = vmul.f32 %v1790, 1.442695
      %v1900 = vpow.pop %v1899
      %v1901 = vmul.f32 %v1791, 1.442695
      %v1902 = vpow.pop %v1901
      %v1903 = vmul.f32 %v1792, 1.442695
      %v1904 = vpow.pop %v1903
      %v1905 = vmul.f32 %v1793, 1.442695
      %v1906 = vpow.pop %v1905
      %v1907 = vmul.f32 %v1794, 1.442695
      %v1908 = vpow.pop %v1907
      %v1909 = vmul.f32 %v1795, 1.442695
      %v1910 = vpow.pop %v1909
      %v1911 = vmul.f32 %v1796, 1.442695
      %v1912 = vpow.pop %v1911
      %v1913 = vmul.f32 %v1797, 1.442695
      %v1914 = vpow.pop %v1913
      %v1915 = vmul.f32 %v1798, 1.442695
      %v1916 = vpow.pop %v1915
      %v1917 = vmul.f32 %v1799, 1.442695
      %v1918 = vpow.pop %v1917
      %v1919 = vmul.f32 %v1800, 1.442695
      %v1920 = vpow.pop %v1919
      %v1921 = vmul.f32 %v1801, 1.442695
      %v1922 = vpow.pop %v1921
      %v1923 = vmul.f32 %v1802, 1.442695
      %v1924 = vpow.pop %v1923
      %v1925 = vmul.f32 %v1803, 1.442695
      %v1926 = vpow.pop %v1925
      %v1927 = vmul.f32 %v1804, 1.442695
      %v1928 = vpow.pop %v1927
      %v1929 = vmul.f32 %v1805, 1.442695
      %v1930 = vpow.pop %v1929
      %v1931 = vmul.f32 %v1806, 1.442695
      %v1932 = vpow.pop %v1931
      %v1933 = vmul.f32 %v1807, 1.442695
      %v1934 = vpow.pop %v1933
      %v1935 = vmul.f32 %v1808, 1.442695
      %v1936 = vpow.pop %v1935
      %v1937 = vadd.f32 %v1810, %v1812
      %1938 = vadd.xlane.f32.xlu0 %v1937
      %v1939 = vpop.xlane.xlu0 %1938
      %v1940 = vadd.f32 %v1814, %v1816
      %1941 = vadd.xlane.f32.xlu0 %v1940
      %v1942 = vpop.xlane.xlu0 %1941
      %v1943 = vadd.f32 %v1818, %v1820
      %1944 = vadd.xlane.f32.xlu0 %v1943
      %v1945 = vpop.xlane.xlu0 %1944
      %v1946 = vadd.f32 %v1822, %v1824
      %1947 = vadd.xlane.f32.xlu0 %v1946
      %v1948 = vpop.xlane.xlu0 %1947
      %v1949 = vadd.f32 %v1826, %v1828
      %1950 = vadd.xlane.f32.xlu0 %v1949
      %v1951 = vpop.xlane.xlu0 %1950
      %v1952 = vadd.f32 %v1830, %v1832
      %1953 = vadd.xlane.f32.xlu0 %v1952
      %v1954 = vpop.xlane.xlu0 %1953
      %v1955 = vadd.f32 %v1834, %v1836
      %1956 = vadd.xlane.f32.xlu0 %v1955
      %v1957 = vpop.xlane.xlu0 %1956
      %v1958 = vadd.f32 %v1838, %v1840
      %1959 = vadd.xlane.f32.xlu0 %v1958
      %v1960 = vpop.xlane.xlu0 %1959
      %v1961 = vadd.f32 %v1842, %v1844
      %1962 = vadd.xlane.f32.xlu0 %v1961
      %v1963 = vpop.xlane.xlu0 %1962
      %v1964 = vadd.f32 %v1846, %v1848
      %1965 = vadd.xlane.f32.xlu0 %v1964
      %v1966 = vpop.xlane.xlu0 %1965
      %v1967 = vadd.f32 %v1850, %v1852
      %1968 = vadd.xlane.f32.xlu0 %v1967
      %v1969 = vpop.xlane.xlu0 %1968
      %v1970 = vadd.f32 %v1854, %v1856
      %1971 = vadd.xlane.f32.xlu0 %v1970
      %v1972 = vpop.xlane.xlu0 %1971
      %v1973 = vadd.f32 %v1858, %v1860
      %1974 = vadd.xlane.f32.xlu0 %v1973
      %v1975 = vpop.xlane.xlu0 %1974
      %v1976 = vadd.f32 %v1862, %v1864
      %1977 = vadd.xlane.f32.xlu0 %v1976
      %v1978 = vpop.xlane.xlu0 %1977
      %v1979 = vadd.f32 %v1866, %v1868
      %1980 = vadd.xlane.f32.xlu0 %v1979
      %v1981 = vpop.xlane.xlu0 %1980
      %v1982 = vadd.f32 %v1870, %v1872
      %1983 = vadd.xlane.f32.xlu0 %v1982
      %v1984 = vpop.xlane.xlu0 %1983
      %v1985 = vadd.f32 %v1874, %v1876
      %1986 = vadd.xlane.f32.xlu0 %v1985
      %v1987 = vpop.xlane.xlu0 %1986
      %v1988 = vadd.f32 %v1878, %v1880
      %1989 = vadd.xlane.f32.xlu0 %v1988
      %v1990 = vpop.xlane.xlu0 %1989
      %v1991 = vadd.f32 %v1882, %v1884
      %1992 = vadd.xlane.f32.xlu0 %v1991
      %v1993 = vpop.xlane.xlu0 %1992
      %v1994 = vadd.f32 %v1886, %v1888
      %1995 = vadd.xlane.f32.xlu0 %v1994
      %v1996 = vpop.xlane.xlu0 %1995
      %v1997 = vadd.f32 %v1890, %v1892
      %1998 = vadd.xlane.f32.xlu0 %v1997
      %v1999 = vpop.xlane.xlu0 %1998
      %v2000 = vadd.f32 %v1894, %v1896
      %2001 = vadd.xlane.f32.xlu0 %v2000
      %v2002 = vpop.xlane.xlu0 %2001
      %v2003 = vadd.f32 %v1898, %v1900
      %2004 = vadd.xlane.f32.xlu0 %v2003
      %v2005 = vpop.xlane.xlu0 %2004
      %v2006 = vadd.f32 %v1902, %v1904
      %2007 = vadd.xlane.f32.xlu0 %v2006
      %v2008 = vpop.xlane.xlu0 %2007
      %v2009 = vadd.f32 %v1906, %v1908
      %2010 = vadd.xlane.f32.xlu0 %v2009
      %v2011 = vpop.xlane.xlu0 %2010
      %v2012 = vadd.f32 %v1910, %v1912
      %2013 = vadd.xlane.f32.xlu0 %v2012
      %v2014 = vpop.xlane.xlu0 %2013
      %v2015 = vadd.f32 %v1914, %v1916
      %2016 = vadd.xlane.f32.xlu0 %v2015
      %v2017 = vpop.xlane.xlu0 %2016
      %v2018 = vadd.f32 %v1918, %v1920
      %2019 = vadd.xlane.f32.xlu0 %v2018
      %v2020 = vpop.xlane.xlu0 %2019
      %v2021 = vadd.f32 %v1922, %v1924
      %2022 = vadd.xlane.f32.xlu0 %v2021
      %v2023 = vpop.xlane.xlu0 %2022
      %v2024 = vadd.f32 %v1926, %v1928
      %2025 = vadd.xlane.f32.xlu0 %v2024
      %v2026 = vpop.xlane.xlu0 %2025
      %v2027 = vadd.f32 %v1930, %v1932
      %2028 = vadd.xlane.f32.xlu0 %v2027
      %v2029 = vpop.xlane.xlu0 %2028
      %v2030 = vadd.f32 %v1934, %v1936
      %2031 = vadd.xlane.f32.xlu0 %v2030
      %v2032 = vpop.xlane.xlu0 %2031
      %v2033 = vrcp.pop %v1939
      %v2034 = vrcp.pop %v1942
      %v2035 = vrcp.pop %v1945
      %v2036 = vrcp.pop %v1948
      %v2037 = vrcp.pop %v1951
      %v2038 = vrcp.pop %v1954
      %v2039 = vrcp.pop %v1957
      %v2040 = vrcp.pop %v1960
      %v2041 = vrcp.pop %v1963
      %v2042 = vrcp.pop %v1966
      %v2043 = vrcp.pop %v1969
      %v2044 = vrcp.pop %v1972
      %v2045 = vrcp.pop %v1975
      %v2046 = vrcp.pop %v1978
      %v2047 = vrcp.pop %v1981
      %v2048 = vrcp.pop %v1984
      %v2049 = vrcp.pop %v1987
      %v2050 = vrcp.pop %v1990
      %v2051 = vrcp.pop %v1993
      %v2052 = vrcp.pop %v1996
      %v2053 = vrcp.pop %v1999
      %v2054 = vrcp.pop %v2002
      %v2055 = vrcp.pop %v2005
      %v2056 = vrcp.pop %v2008
      %v2057 = vrcp.pop %v2011
      %v2058 = vrcp.pop %v2014
      %v2059 = vrcp.pop %v2017
      %v2060 = vrcp.pop %v2020
      %v2061 = vrcp.pop %v2023
      %v2062 = vrcp.pop %v2026
      %v2063 = vrcp.pop %v2029
      %v2064 = vrcp.pop %v2032
      %v2065 = vmul.f32 %v1810, %v2033
      %v2066 = vmul.f32 %v1812, %v2033
      %v2067 = vmul.f32 %v1814, %v2034
      %v2068 = vmul.f32 %v1816, %v2034
      %v2069 = vmul.f32 %v1818, %v2035
      %v2070 = vmul.f32 %v1820, %v2035
      %v2071 = vmul.f32 %v1822, %v2036
      %v2072 = vmul.f32 %v1824, %v2036
      %v2073 = vmul.f32 %v1826, %v2037
      %v2074 = vmul.f32 %v1828, %v2037
      %v2075 = vmul.f32 %v1830, %v2038
      %v2076 = vmul.f32 %v1832, %v2038
      %v2077 = vmul.f32 %v1834, %v2039
      %v2078 = vmul.f32 %v1836, %v2039
      %v2079 = vmul.f32 %v1838, %v2040
      %v2080 = vmul.f32 %v1840, %v2040
      %v2081 = vmul.f32 %v1842, %v2041
      %v2082 = vmul.f32 %v1844, %v2041
      %v2083 = vmul.f32 %v1846, %v2042
      %v2084 = vmul.f32 %v1848, %v2042
      %v2085 = vmul.f32 %v1850, %v2043
      %v2086 = vmul.f32 %v1852, %v2043
      %v2087 = vmul.f32 %v1854, %v2044
      %v2088 = vmul.f32 %v1856, %v2044
      %v2089 = vmul.f32 %v1858, %v2045
      %v2090 = vmul.f32 %v1860, %v2045
      %v2091 = vmul.f32 %v1862, %v2046
      %v2092 = vmul.f32 %v1864, %v2046
      %v2093 = vmul.f32 %v1866, %v2047
      %v2094 = vmul.f32 %v1868, %v2047
      %v2095 = vmul.f32 %v1870, %v2048
      %v2096 = vmul.f32 %v1872, %v2048
      %v2097 = vmul.f32 %v1874, %v2049
      %v2098 = vmul.f32 %v1876, %v2049
      %v2099 = vmul.f32 %v1878, %v2050
      %v2100 = vmul.f32 %v1880, %v2050
      %v2101 = vmul.f32 %v1882, %v2051
      %v2102 = vmul.f32 %v1884, %v2051
      %v2103 = vmul.f32 %v1886, %v2052
      %v2104 = vmul.f32 %v1888, %v2052
      %v2105 = vmul.f32 %v1890, %v2053
      %v2106 = vmul.f32 %v1892, %v2053
      %v2107 = vmul.f32 %v1894, %v2054
      %v2108 = vmul.f32 %v1896, %v2054
      %v2109 = vmul.f32 %v1898, %v2055
      %v2110 = vmul.f32 %v1900, %v2055
      %v2111 = vmul.f32 %v1902, %v2056
      %v2112 = vmul.f32 %v1904, %v2056
      %v2113 = vmul.f32 %v1906, %v2057
      %v2114 = vmul.f32 %v1908, %v2057
      %v2115 = vmul.f32 %v1910, %v2058
      %v2116 = vmul.f32 %v1912, %v2058
      %v2117 = vmul.f32 %v1914, %v2059
      %v2118 = vmul.f32 %v1916, %v2059
      %v2119 = vmul.f32 %v1918, %v2060
      %v2120 = vmul.f32 %v1920, %v2060
      %v2121 = vmul.f32 %v1922, %v2061
      %v2122 = vmul.f32 %v1924, %v2061
      %v2123 = vmul.f32 %v1926, %v2062
      %v2124 = vmul.f32 %v1928, %v2062
      %v2125 = vmul.f32 %v1930, %v2063
      %v2126 = vmul.f32 %v1932, %v2063
      %v2127 = vmul.f32 %v1934, %v2064
      %v2128 = vmul.f32 %v1936, %v2064
      %v2129 = vpack.c.bf16 %v2067, %v2065
      %v2130 = vpack.c.bf16 %v2068, %v2066
      %v2131 = vpack.c.bf16 %v2071, %v2069
      %v2132 = vpack.c.bf16 %v2072, %v2070
      %v2133 = vpack.c.bf16 %v2075, %v2073
      %v2134 = vpack.c.bf16 %v2076, %v2074
      %v2135 = vpack.c.bf16 %v2079, %v2077
      %v2136 = vpack.c.bf16 %v2080, %v2078
      %v2137 = vpack.c.bf16 %v2083, %v2081
      %v2138 = vpack.c.bf16 %v2084, %v2082
      %v2139 = vpack.c.bf16 %v2087, %v2085
      %v2140 = vpack.c.bf16 %v2088, %v2086
      %v2141 = vpack.c.bf16 %v2091, %v2089
      %v2142 = vpack.c.bf16 %v2092, %v2090
      %v2143 = vpack.c.bf16 %v2095, %v2093
      %v2144 = vpack.c.bf16 %v2096, %v2094
      %v2145 = vpack.c.bf16 %v2099, %v2097
      %v2146 = vpack.c.bf16 %v2100, %v2098
      %v2147 = vpack.c.bf16 %v2103, %v2101
      %v2148 = vpack.c.bf16 %v2104, %v2102
      %v2149 = vpack.c.bf16 %v2107, %v2105
      %v2150 = vpack.c.bf16 %v2108, %v2106
      %v2151 = vpack.c.bf16 %v2111, %v2109
      %v2152 = vpack.c.bf16 %v2112, %v2110
      %v2153 = vpack.c.bf16 %v2115, %v2113
      %v2154 = vpack.c.bf16 %v2116, %v2114
      %v2155 = vpack.c.bf16 %v2119, %v2117
      %v2156 = vpack.c.bf16 %v2120, %v2118
      %v2157 = vpack.c.bf16 %v2123, %v2121
      %v2158 = vpack.c.bf16 %v2124, %v2122
      %v2159 = vpack.c.bf16 %v2127, %v2125
      %v2160 = vpack.c.bf16 %v2128, %v2126
      %2161 = vmatprep.subr.bf16.mxu0 %v2130
      %2162 = vmatpush1.bf16.xpose.msra.mxu0 %v2129
      %2163 = vmatprep.subr.bf16.mxu0 %v2132
      %2164 = vmatpush1.bf16.xpose.msra.mxu0 %v2131
      %2165 = vmatprep.subr.bf16.mxu0 %v2134
      %2166 = vmatpush1.bf16.xpose.msra.mxu0 %v2133
      %2167 = vmatprep.subr.bf16.mxu0 %v2136
      %2168 = vmatpush1.bf16.xpose.msra.mxu0 %v2135
      %2169 = vmatprep.subr.bf16.mxu0 %v2138
      %2170 = vmatpush1.bf16.xpose.msra.mxu0 %v2137
      %2171 = vmatprep.subr.bf16.mxu0 %v2140
      %2172 = vmatpush1.bf16.xpose.msra.mxu0 %v2139
      %2173 = vmatprep.subr.bf16.mxu0 %v2142
      %2174 = vmatpush1.bf16.xpose.msra.mxu0 %v2141
      %2175 = vmatprep.subr.bf16.mxu0 %v2144
      %2176 = vmatpush1.bf16.xpose.msra.mxu0 %v2143
      %2177 = vmatprep.subr.bf16.mxu0 %v2146
      %2178 = vmatpush1.bf16.xpose.msra.mxu0 %v2145
      %2179 = vmatprep.subr.bf16.mxu0 %v2148
      %2180 = vmatpush1.bf16.xpose.msra.mxu0 %v2147
      %2181 = vmatprep.subr.bf16.mxu0 %v2150
      %2182 = vmatpush1.bf16.xpose.msra.mxu0 %v2149
      %2183 = vmatprep.subr.bf16.mxu0 %v2152
      %2184 = vmatpush1.bf16.xpose.msra.mxu0 %v2151
      %2185 = vmatprep.subr.bf16.mxu0 %v2154
      %2186 = vmatpush1.bf16.xpose.msra.mxu0 %v2153
      %2187 = vmatprep.subr.bf16.mxu0 %v2156
      %2188 = vmatpush1.bf16.xpose.msra.mxu0 %v2155
      %2189 = vmatprep.subr.bf16.mxu0 %v2158
      %2190 = vmatpush1.bf16.xpose.msra.mxu0 %v2157
      %2191 = vmatprep.subr.bf16.mxu0 %v2160
      %2192 = vmatpush1.bf16.xpose.msra.mxu0 %v2159
      %2193 = vmatprep.mubr.bf16.mxu0 %v1375
      %2194 = vmatmul.mubr.bf16.gmra.mrb[0].mxu0 %v1374
      %v2195 = vpop.f32.mrb[0].mxu0
      %v2196 = vadd.f32 0.0, %v2195
      %v2197 = vpop.f32.mrb[0].mxu0
      %v2198 = vadd.f32 0.0, %v2197
      %v2199 = vpop.f32.mrb[0].mxu0
      %v2200 = vadd.f32 0.0, %v2199
      %v2201 = vpop.f32.mrb[0].mxu0
      %v2202 = vadd.f32 0.0, %v2201
      %2203 = vdwg.mxu0
      %v2204 = vld [vmem:[%s5] sm:$0xff]
      %v2205 = vld [vmem:[%s5 + $0x8] sm:$0xff]
      %v2206 = vld [vmem:[%s5 + $0x10] sm:$0xff]
      %v2207 = vld [vmem:[%s5 + $0x18] sm:$0xff]
      %v2208 = vpack.c.bf16 %v2205, %v2204
      %v2209 = vpack.c.bf16 %v2207, %v2206
      %v2210 = vpack.c.bf16 %v1366, %v1362
      %v2211 = vpack.c.bf16 %v1368, %v1364
      %v2212 = vpack.c.bf16 %v2200, %v2196
      %v2213 = vpack.c.bf16 %v2202, %v2198
      %v2214 = vld [vmem:[%s6] sm:$0xff]
      %v2215 = vld [vmem:[%s6 + $0x8] sm:$0xff]
      %v2216 = vld [vmem:[%s6 + $0x10] sm:$0xff]
      %v2217 = vld [vmem:[%s6 + $0x18] sm:$0xff]
      %2219 = vset.pattern.permute.xlu0 0
      %2220 = vperm.xlu0 %2219, %v2214
      %v2221 = vpop.permute.xlu0 %2220
      %2224 = vset.pattern.permute.xlu0 0
      %2225 = vperm.xlu0 %2224, %v2215
      %v2226 = vpop.permute.xlu0 %2225
      %2229 = vset.pattern.permute.xlu0 0
      %2230 = vperm.xlu0 %2229, %v2216
      %v2231 = vpop.permute.xlu0 %2230
      %2234 = vset.pattern.permute.xlu0 0
      %2235 = vperm.xlu0 %2234, %v2217
      %v2236 = vpop.permute.xlu0 %2235
      %v2239 = vsel %vm322, %v2208, 0
      %v2242 = vsel %vm322, %v2209, 0
      %2244 = vmatprep.subr.bf16.mxu0 %v2211
      %2245 = vmatpush1.bf16.msra.mxu0 %v2210
      %2246 = vmatprep.subr.bf16.mxu0 %v2213
      %2247 = vmatpush1.bf16.msra.mxu0 %v2212
      %2248 = vmatprep.subr.bf16.mxu0 0
      %2249 = vmatpush1.bf16.msra.mxu0 0
      %2250 = vmatprep.subr.bf16.mxu0 0
      %2251 = vmatpush1.bf16.msra.mxu0 0
      %2252 = vmatprep.subr.bf16.mxu0 0
      %2253 = vmatpush1.bf16.msra.mxu0 0
      %2254 = vmatprep.subr.bf16.mxu0 0
      %2255 = vmatpush1.bf16.msra.mxu0 0
      %2256 = vmatprep.subr.bf16.mxu0 0
      %2257 = vmatpush1.bf16.msra.mxu0 0
      %2258 = vmatprep.subr.bf16.mxu0 0
      %2259 = vmatpush1.bf16.msra.mxu0 0
      %2260 = vmatprep.subr.bf16.mxu0 0
      %2261 = vmatpush1.bf16.msra.mxu0 0
      %2262 = vmatprep.subr.bf16.mxu0 0
      %2263 = vmatpush1.bf16.msra.mxu0 0
      %2264 = vmatprep.subr.bf16.mxu0 0
      %2265 = vmatpush1.bf16.msra.mxu0 0
      %2266 = vmatprep.subr.bf16.mxu0 0
      %2267 = vmatpush1.bf16.msra.mxu0 0
      %2268 = vmatprep.subr.bf16.mxu0 0
      %2269 = vmatpush1.bf16.msra.mxu0 0
      %2270 = vmatprep.subr.bf16.mxu0 0
      %2271 = vmatpush1.bf16.msra.mxu0 0
      %2272 = vmatprep.subr.bf16.mxu0 0
      %2273 = vmatpush1.bf16.msra.mxu0 0
      %2274 = vmatprep.subr.bf16.mxu0 0
      %2275 = vmatpush1.bf16.msra.mxu0 0
      %2276 = vmatprep.mubr.bf16.mxu0 0
      %2277 = vmatmul.mubr.bf16.gmra.mrb[0].mxu0 %v2239
      %v2278 = vpop.f32.mrb[0].mxu0
      %v2279 = vadd.f32 %v2221, %v2278
      %v2280 = vpop.f32.mrb[0].mxu0
      %v2281 = vadd.f32 %v2221, %v2280
      %v2282 = vpop.f32.mrb[0].mxu0
      %v2283 = vadd.f32 %v2226, %v2282
      %v2284 = vpop.f32.mrb[0].mxu0
      %v2285 = vadd.f32 %v2226, %v2284
      %2286 = vmatprep.mubr.bf16.mxu0 0
      %2287 = vmatmul.mubr.bf16.gmra.mrb[0].mxu0 %v2242
      %v2288 = vpop.f32.mrb[0].mxu0
      %v2289 = vadd.f32 %v2231, %v2288
      %v2290 = vpop.f32.mrb[0].mxu0
      %v2291 = vadd.f32 %v2231, %v2290
      %v2292 = vpop.f32.mrb[0].mxu0
      %v2293 = vadd.f32 %v2236, %v2292
      %v2294 = vpop.f32.mrb[0].mxu0
      %v2295 = vadd.f32 %v2236, %v2294
      %2296 = vdwg.mxu0
      %2297 = vst [vmem:[%s278] sm:$0xff] %v2279
      %2298 = vst [vmem:[%s278 + $0x8] sm:$0xff] %v2281
      %2299 = vst [vmem:[%s278 + $0x10] sm:$0xff] %v2283
      %2300 = vst [vmem:[%s278 + $0x18] sm:$0xff] %v2285
      %2301 = vst [vmem:[%s278 + $0x20] sm:$0xff] %v2289
      %2302 = vst [vmem:[%s278 + $0x28] sm:$0xff] %v2291
      %2303 = vst [vmem:[%s278 + $0x30] sm:$0xff] %v2293
      %2304 = vst [vmem:[%s278 + $0x38] sm:$0xff] %v2295
      %p2305 = scmp.lt.s32.totalorder %s18, 1
      %s2306 = scalar_select %p2305, %s18, 1
      %s2307 = smul.addr %s2306, 8
      %s2308 = smul.addr %s2307, 8
      %s2309 = scalar_lea.vmem %s7, %s2308
      // Predicated region
      $region49: #{pyramid_attention_forward.1} parent=47 // pred_check
        %p2310 = pneg %p188
      $region50: #{pyramid_attention_forward.1} parent=47 // pred_check_branch
        %2312 = sbr.rel (%p2310) target = $region52
      $region51: #{pyramid_attention_forward.1} parent=47 // pred_region
        _
      $region52: #{pyramid_attention_forward.1} parent=47 // pred_fallthru
        _
    $region48: #{pyramid_attention_forward.1} parent=5 // pred_fallthru
      _
    %p2313 = scmp.le.s32.totalorder 2, %s13
    // Predicated region
    $region53: #{pyramid_attention_forward.1} parent=5 // pred_check
      %p2314 = pneg %p2313
    $region54: #{pyramid_attention_forward.1} parent=5 // pred_check_branch
      %2316 = sbr.rel (%p2314) target = $region56
    $region55: #{pyramid_attention_forward.1} parent=5 // pred_region
      %s2317 = ssub.s32 %s13, 2
      // Predicated region
      $region57: #{pyramid_attention_forward.1} parent=55 // pred_check
        %p2318 = pneg %p194
      $region58: #{pyramid_attention_forward.1} parent=55 // pred_check_branch
        %2320 = sbr.rel (%p2318) target = $region60
      $region59: #{pyramid_attention_forward.1} parent=55 // pred_region
        %p2321 = scmp.lt.s32.totalorder %s19, 1
        %s2322 = scalar_select %p2321, %s19, 1
        %s2323 = smul.addr %s2322, 8
        %s2324 = smul.addr %s2323, 8
        %s2325 = scalar_lea.vmem %s7, %s2324
      $region60: #{pyramid_attention_forward.1} parent=55 // pred_fallthru
        _
    $region56: #{pyramid_attention_forward.1} parent=5 // pred_fallthru
      _
  $region6: #{pyramid_attention_forward.1} parent=0 // loop_footer
    %s17 = sadd.s32 1, %s13
  $region7: #{pyramid_attention_forward.1} parent=0 // loop_footer_branch
    %12 = sbr.rel target = $region3
  $region8: #{pyramid_attention_forward.1} parent=0 // loop_exit
    _

</llo_original>
